<compile_context>
chip_gen: v6e
topology: v6e:2x2x1
jax: 0.10.0
libtpu: 0.0.40
codegen_flags: <defaults>
</compile_context>

<pallas_src>
import jax
import jax.numpy as jnp
from jax import lax
from jax.experimental import pallas as pl
from jax.experimental.pallas import tpu as pltpu


def _round_up(x, m):
    return ((x + m - 1) // m) * m


def _make_resblock_kernel(H, W, Cin_p, Cout_p, Cout, pad, B_TILE):
    """Fused kernel closure for static (H, W, padded channels, halo, batch tile)."""
    HW = H * W
    SEG = HW + 2 * pad            # per-image flat segment: [halo | HW | halo]
    Cmax_p = max(Cin_p, Cout_p)

    def kernel(x_ref, w1ds_ref, w2_ref, mask_ref, out_ref, xf, p):
        # Column-boundary masks (1, HW), f32: 1.0 where the left/right
        # neighbour column is inside the image.  Same pattern for every image.
        m_left = mask_ref[0:1, :]      # taps with dw == 0
        m_right = mask_ref[1:2, :]     # taps with dw == 2

        # --- zero ONLY the halo slices (interiors fully overwritten below) ---
        for b in range(B_TILE):
            base = b * SEG
            xf[:, base:base + pad] = jnp.zeros((Cmax_p, pad), xf.dtype)
            xf[:, base + pad + HW:base + SEG] = jnp.zeros((Cmax_p, pad), xf.dtype)

        def im2col(C):
            # Build p[:9*C, :] from xf[:C, ...]; mask math in f32, cast to bf16
            # only at the store feeding the MXU (v5e-safe).
            for k in range(9):                       # static unroll, 9 taps
                dh, dw = k // 3, k % 3
                for b in range(B_TILE):
                    off = b * SEG + pad + (dh - 1) * W + (dw - 1)
                    s = xf[0:C, off:off + HW]        # (C, HW) shifted f32 view
                    if dw == 0:
                        s = s * m_left
                    elif dw == 2:
                        s = s * m_right
                    p[k * C:(k + 1) * C, b * HW:(b + 1) * HW] = s.astype(p.dtype)

        # ---- conv1 (3x3, padding=1) fused with the 1x1 downsample -----------
        for b in range(B_TILE):
            xf[0:Cin_p, b * SEG + pad:b * SEG + pad + HW] = \
                x_ref[b].astype(xf.dtype)
        im2col(Cin_p)

        # (2*Cout_p, 9*Cin_p) @ (9*Cin_p, B_TILE*HW): rows [0,Cout_p) = conv1,
        # rows [Cout_p, 2*Cout_p) = 1x1 downsample (weight at centre tap only).
        r1 = jnp.dot(w1ds_ref[...], p[0:9 * Cin_p, :],
                     preferred_element_type=jnp.float32)
        relu1 = jnp.maximum(r1[0:Cout_p, :], 0.0)        # (Cout_p, B_TILE*HW)
        ds = r1[Cout_p:2 * Cout_p, :]                    # residual branch

        # ---- conv2 (3x3, padding='same') + skip + final ReLU -----------------
        for b in range(B_TILE):
            xf[0:Cout_p, b * SEG + pad:b * SEG + pad + HW] = \
                relu1[:, b * HW:(b + 1) * HW]
        im2col(Cout_p)

        acc = jnp.dot(w2_ref[...], p[0:9 * Cout_p, :],
                      preferred_element_type=jnp.float32) + ds
        y = jnp.maximum(acc, 0.0)
        for b in range(B_TILE):
            out_ref[b] = y[0:Cout, b * HW:(b + 1) * HW].astype(out_ref.dtype)

    return kernel


def _pick_b_tile(N, Cin_p, Cout_p, HW, pad, budget_bytes=24 << 20):
    """Largest batch tile that divides N and keeps scratch + blocks modest."""
    Cmax_p = max(Cin_p, Cout_p)
    SEG = HW + 2 * pad
    for b in (8, 4, 2, 1):
        if N % b:
            continue
        scratch = Cmax_p * b * SEG * 4 + 9 * Cmax_p * b * HW * 2
        blocks = 2 * b * (Cin_p + Cout_p) * HW * 4      # double-buffered in/out
        if scratch + blocks <= budget_bytes:
            return b
    return 1


def resblock_forward(x_nchw, w1_oihw, w2_oihw, wds_oihw):
    """x_nchw: (N, Cin, H, W); weights in PyTorch OIHW. Returns (N, Cout, H, W)."""
    N, Cin, H, W = x_nchw.shape
    Cout = w1_oihw.shape[0]
    HW = H * W
    pad = _round_up(W + 1, 128)                  # lane-aligned halo >= W+1
    Cin_p = _round_up(Cin, 16)                   # bf16 sublane-tile alignment
    Cout_p = _round_up(Cout, 16)
    Cmax_p = max(Cin_p, Cout_p)
    SEG = HW + 2 * pad

    B_TILE = _pick_b_tile(N, Cin_p, Cout_p, HW, pad)
    lanes = B_TILE * HW

    f32 = jnp.float32

    # Activations: NCHW -> (N, Cin_p, HW), zero-padded channels (cheap XLA pad).
    x = x_nchw.reshape(N, Cin, HW)
    if Cin_p > Cin:
        x = jnp.pad(x, ((0, 0), (0, Cin_p - Cin), (0, 0)))

    # conv1 OIHW -> (Cout_p, 9*Cin_p) with K index = (dh*3+dw)*Cin_p + ci.
    w1 = jnp.transpose(w1_oihw, (0, 2, 3, 1))                    # (Cout,3,3,Cin)
    w1 = jnp.pad(w1, ((0, Cout_p - Cout), (0, 0), (0, 0), (0, Cin_p - Cin)))
    w1 = w1.reshape(Cout_p, 9 * Cin_p)
    # 1x1 downsample folded in as Cout_p extra output rows, centre tap (k=4).
    wds = jnp.zeros((Cout_p, 9 * Cin_p), f32).at[
        :Cout, 4 * Cin_p:4 * Cin_p + Cin].set(wds_oihw[:, :, 0, 0])
    w1ds = jnp.concatenate([w1, wds], axis=0).astype(jnp.bfloat16)

    # conv2 OIHW -> (Cout_p, 9*Cout_p), bf16.
    w2 = jnp.transpose(w2_oihw, (0, 2, 3, 1))
    w2 = jnp.pad(w2, ((0, Cout_p - Cout), (0, 0), (0, 0), (0, Cout_p - Cout)))
    w2 = w2.reshape(Cout_p, 9 * Cout_p).astype(jnp.bfloat16)

    # Column-validity masks for the dw=0 / dw=2 taps (same for every image).
    col = jnp.arange(HW, dtype=jnp.int32) % W
    masks = jnp.stack([col != 0, col != W - 1]).astype(f32)      # (2, HW)

    kernel = _make_resblock_kernel(H, W, Cin_p, Cout_p, Cout, pad, B_TILE)

    # VMEM sizing (scratch + double-buffered blocks) and a cost hint for XLA.
    scratch_bytes = Cmax_p * B_TILE * SEG * 4 + 9 * Cmax_p * lanes * 2
    block_bytes = (B_TILE * Cin_p * HW * 4 + B_TILE * Cout * HW * 4
                   + 2 * Cout_p * 9 * Cin_p * 2 + Cout_p * 9 * Cout_p * 2
                   + 2 * HW * 4)
    vmem_limit = int(min(128 << 20,
                         max(32 << 20, 2 * (scratch_bytes + 2 * block_bytes))))
    steps = N // B_TILE
    flops = 2 * steps * lanes * (2 * Cout_p * 9 * Cin_p + Cout_p * 9 * Cout_p)
    bytes_accessed = int(x.size * 4 + w1ds.size * 2 + w2.size * 2
                         + masks.size * 4 + N * Cout * HW * 4)

    out_flat = pl.pallas_call(
        kernel,
        out_shape=jax.ShapeDtypeStruct((N, Cout, HW), x_nchw.dtype),
        grid_spec=pltpu.PrefetchScalarGridSpec(
            num_scalar_prefetch=0,
            grid=(steps,),
            in_specs=[
                pl.BlockSpec((B_TILE, Cin_p, HW), lambda n: (n, 0, 0)),     # x
                pl.BlockSpec((2 * Cout_p, 9 * Cin_p), lambda n: (0, 0)),    # w1+ds
                pl.BlockSpec((Cout_p, 9 * Cout_p), lambda n: (0, 0)),       # w2
                pl.BlockSpec((2, HW), lambda n: (0, 0)),                    # masks
            ],
            out_specs=pl.BlockSpec((B_TILE, Cout, HW), lambda n: (n, 0, 0)),
            scratch_shapes=[
                pltpu.VMEM((Cmax_p, B_TILE * SEG), jnp.float32),   # shared halo
                pltpu.VMEM((9 * Cmax_p, lanes), jnp.bfloat16),     # shared patch
            ],
        ),
        compiler_params=pltpu.CompilerParams(
            dimension_semantics=("parallel",),       # batch axis -> both TCs
            vmem_limit_bytes=vmem_limit),
        cost_estimate=pl.CostEstimate(
            flops=flops, transcendentals=0, bytes_accessed=bytes_accessed),
    )(x, w1ds, w2, masks)

    return out_flat.reshape(N, Cout, H, W)


def resblock_reference(x, w1, w2, wds):
    """Pure-JAX NCHW reference matching the PyTorch forward (f32 HIGHEST)."""
    dn = ("NCHW", "OIHW", "NCHW")
    hi = lax.Precision.HIGHEST
    c1 = lax.conv_general_dilated(x, w1, (1, 1), ((1, 1), (1, 1)),
                                  dimension_numbers=dn, precision=hi)
    r1 = jnp.maximum(c1, 0.0)
    c2 = lax.conv_general_dilated(r1, w2, (1, 1), ((1, 1), (1, 1)),
                                  dimension_numbers=dn, precision=hi)
    ds = lax.conv_general_dilated(x, wds, (1, 1), ((0, 0), (0, 0)),
                                  dimension_numbers=dn, precision=hi)
    return jnp.maximum(c2 + ds, 0.0)


if __name__ == "__main__":
    key = jax.random.PRNGKey(0)
    k1, k2, k3, k4 = jax.random.split(key, 4)

    N, Cin, Cout, H, W = 2, 4, 8, 16, 16
    x = jax.random.normal(k1, (N, Cin, H, W), jnp.float32)
    # Deterministic synthetic weights (Conv2d shapes from __init__, bias=False).
    w1 = 0.1 * jax.random.normal(k2, (Cout, Cin, 3, 3), jnp.float32)    # conv1
    w2 = 0.1 * jax.random.normal(k3, (Cout, Cout, 3, 3), jnp.float32)   # conv2
    wds = 0.1 * jax.random.normal(k4, (Cout, Cin, 1, 1), jnp.float32)   # downsample

    out = jax.block_until_ready(resblock_forward(x, w1, w2, wds))
    ref = jax.block_until_ready(resblock_reference(x, w1, w2, wds))

    assert out.shape == (N, Cout, H, W), out.shape
    # Kernel matmuls use bf16 MXU inputs (f32 accumulate); reference is f32
    # HIGHEST, so allow a correspondingly looser tolerance.
    if not jnp.allclose(out, ref, atol=5e-2, rtol=5e-2):
        raise SystemExit(
            "mismatch: max abs err = %e" % float(jnp.max(jnp.abs(out - ref))))
    print("KERNEL_OK")
</pallas_src>

<mosaic_0001>
module attributes {stable_mosaic.version = 11 : i64} {
  func.func @kernel(%arg0: i32, %arg1: memref<2x16x256xf32, #tpu.memory_space<vmem>>, %arg2: memref<32x144xbf16, #tpu.memory_space<vmem>>, %arg3: memref<16x144xbf16, #tpu.memory_space<vmem>>, %arg4: memref<2x256xf32, #tpu.memory_space<vmem>>, %arg5: memref<2x8x256xf32, #tpu.memory_space<vmem>>, %arg6: memref<16x1024xf32, #tpu.memory_space<vmem>>, %arg7: memref<144x512xbf16, #tpu.memory_space<vmem>>) attributes {dimension_semantics = [#tpu.dimension_semantics<parallel>], iteration_bounds = array<i64: 1>, scalar_prefetch = 0 : i64, scratch_operands = 2 : i64, tpu.core_type = #tpu.core_type<tc>, window_params = [{transform_indices = @transform_0, window_bounds = array<i64: 2, 16, 256>}, {pipeline_mode = #tpu.pipeline_mode<synchronous>, transform_indices = @transform_1, window_bounds = array<i64: 32, 144>}, {pipeline_mode = #tpu.pipeline_mode<synchronous>, transform_indices = @transform_2, window_bounds = array<i64: 16, 144>}, {pipeline_mode = #tpu.pipeline_mode<synchronous>, transform_indices = @transform_3, window_bounds = array<i64: 2, 256>}, {transform_indices = @transform_4, window_bounds = array<i64: 2, 8, 256>}]} {
    %c0 = arith.constant 0 : index
    %c0_0 = arith.constant 0 : index
    %0 = vector.load %arg4[%c0, %c0_0] : memref<2x256xf32, #tpu.memory_space<vmem>>, vector<1x256xf32>
    %c1 = arith.constant 1 : index
    %c0_1 = arith.constant 0 : index
    %1 = vector.load %arg4[%c1, %c0_1] : memref<2x256xf32, #tpu.memory_space<vmem>>, vector<1x256xf32>
    %cst = arith.constant 0.000000e+00 : f32
    %2 = vector.broadcast %cst : f32 to vector<16x128xf32>
    %c0_2 = arith.constant 0 : index
    %c0_3 = arith.constant 0 : index
    %3 = vector.load %arg6[%c0_2, %c0_3] : memref<16x1024xf32, #tpu.memory_space<vmem>>, vector<16x128xf32>
    tpu.vector_store %arg6[%c0_2, %c0_3], %2 {strides = array<i32>} : memref<16x1024xf32, #tpu.memory_space<vmem>>, vector<16x128xf32>,
    %cst_4 = arith.constant 0.000000e+00 : f32
    %4 = vector.broadcast %cst_4 : f32 to vector<16x128xf32>
    %c0_5 = arith.constant 0 : index
    %c384 = arith.constant 384 : index
    %5 = vector.load %arg6[%c0_5, %c384] : memref<16x1024xf32, #tpu.memory_space<vmem>>, vector<16x128xf32>
    tpu.vector_store %arg6[%c0_5, %c384], %4 {strides = array<i32>} : memref<16x1024xf32, #tpu.memory_space<vmem>>, vector<16x128xf32>,
    %cst_6 = arith.constant 0.000000e+00 : f32
    %6 = vector.broadcast %cst_6 : f32 to vector<16x128xf32>
    %c0_7 = arith.constant 0 : index
    %c512 = arith.constant 512 : index
    %7 = vector.load %arg6[%c0_7, %c512] : memref<16x1024xf32, #tpu.memory_space<vmem>>, vector<16x128xf32>
    tpu.vector_store %arg6[%c0_7, %c512], %6 {strides = array<i32>} : memref<16x1024xf32, #tpu.memory_space<vmem>>, vector<16x128xf32>,
    %cst_8 = arith.constant 0.000000e+00 : f32
    %8 = vector.broadcast %cst_8 : f32 to vector<16x128xf32>
    %c0_9 = arith.constant 0 : index
    %c896 = arith.constant 896 : index
    %9 = vector.load %arg6[%c0_9, %c896] : memref<16x1024xf32, #tpu.memory_space<vmem>>, vector<16x128xf32>
    tpu.vector_store %arg6[%c0_9, %c896], %8 {strides = array<i32>} : memref<16x1024xf32, #tpu.memory_space<vmem>>, vector<16x128xf32>,
    %c0_10 = arith.constant 0 : index
    %c0_11 = arith.constant 0 : index
    %c0_12 = arith.constant 0 : index
    %10 = vector.load %arg1[%c0_10, %c0_11, %c0_12] : memref<2x16x256xf32, #tpu.memory_space<vmem>>, vector<1x16x256xf32>
    %11 = vector.shape_cast %10 : vector<1x16x256xf32> to vector<16x256xf32>
    %c0_13 = arith.constant 0 : index
    %c128 = arith.constant 128 : index
    %12 = vector.load %arg6[%c0_13, %c128] : memref<16x1024xf32, #tpu.memory_space<vmem>>, vector<16x256xf32>
    tpu.vector_store %arg6[%c0_13, %c128], %11 {strides = array<i32>} : memref<16x1024xf32, #tpu.memory_space<vmem>>, vector<16x256xf32>,
    %c1_14 = arith.constant 1 : index
    %c0_15 = arith.constant 0 : index
    %c0_16 = arith.constant 0 : index
    %13 = vector.load %arg1[%c1_14, %c0_15, %c0_16] : memref<2x16x256xf32, #tpu.memory_space<vmem>>, vector<1x16x256xf32>
    %14 = vector.shape_cast %13 : vector<1x16x256xf32> to vector<16x256xf32>
    %c0_17 = arith.constant 0 : index
    %c640 = arith.constant 640 : index
    %15 = vector.load %arg6[%c0_17, %c640] : memref<16x1024xf32, #tpu.memory_space<vmem>>, vector<16x256xf32>
    tpu.vector_store %arg6[%c0_17, %c640], %14 {strides = array<i32>} : memref<16x1024xf32, #tpu.memory_space<vmem>>, vector<16x256xf32>,
    %c0_18 = arith.constant 0 : index
    %c111 = arith.constant 111 : index
    %16 = vector.load %arg6[%c0_18, %c111] : memref<16x1024xf32, #tpu.memory_space<vmem>>, vector<16x256xf32>
    %17 = vector.broadcast %0 : vector<1x256xf32> to vector<16x256xf32>
    %18 = arith.mulf %16, %17 : vector<16x256xf32>
    %19 = arith.truncf %18 : vector<16x256xf32> to vector<16x256xbf16>
    %c0_19 = arith.constant 0 : index
    %c0_20 = arith.constant 0 : index
    %20 = vector.load %arg7[%c0_19, %c0_20] : memref<144x512xbf16, #tpu.memory_space<vmem>>, vector<16x256xbf16>
    tpu.vector_store %arg7[%c0_19, %c0_20], %19 {strides = array<i32>} : memref<144x512xbf16, #tpu.memory_space<vmem>>, vector<16x256xbf16>,
    %c0_21 = arith.constant 0 : index
    %c623 = arith.constant 623 : index
    %21 = vector.load %arg6[%c0_21, %c623] : memref<16x1024xf32, #tpu.memory_space<vmem>>, vector<16x256xf32>
    %22 = vector.broadcast %0 : vector<1x256xf32> to vector<16x256xf32>
    %23 = arith.mulf %21, %22 : vector<16x256xf32>
    %24 = arith.truncf %23 : vector<16x256xf32> to vector<16x256xbf16>
    %c0_22 = arith.constant 0 : index
    %c256 = arith.constant 256 : index
    %25 = vector.load %arg7[%c0_22, %c256] : memref<144x512xbf16, #tpu.memory_space<vmem>>, vector<16x256xbf16>
    tpu.vector_store %arg7[%c0_22, %c256], %24 {strides = array<i32>} : memref<144x512xbf16, #tpu.memory_space<vmem>>, vector<16x256xbf16>,
    %c0_23 = arith.constant 0 : index
    %c112 = arith.constant 112 : index
    %26 = vector.load %arg6[%c0_23, %c112] : memref<16x1024xf32, #tpu.memory_space<vmem>>, vector<16x256xf32>
    %27 = arith.truncf %26 : vector<16x256xf32> to vector<16x256xbf16>
    %c16 = arith.constant 16 : index
    %c0_24 = arith.constant 0 : index
    %28 = vector.load %arg7[%c16, %c0_24] : memref<144x512xbf16, #tpu.memory_space<vmem>>, vector<16x256xbf16>
    tpu.vector_store %arg7[%c16, %c0_24], %27 {strides = array<i32>} : memref<144x512xbf16, #tpu.memory_space<vmem>>, vector<16x256xbf16>,
    %c0_25 = arith.constant 0 : index
    %c624 = arith.constant 624 : index
    %29 = vector.load %arg6[%c0_25, %c624] : memref<16x1024xf32, #tpu.memory_space<vmem>>, vector<16x256xf32>
    %30 = arith.truncf %29 : vector<16x256xf32> to vector<16x256xbf16>
    %c16_26 = arith.constant 16 : index
    %c256_27 = arith.constant 256 : index
    %31 = vector.load %arg7[%c16_26, %c256_27] : memref<144x512xbf16, #tpu.memory_space<vmem>>, vector<16x256xbf16>
    tpu.vector_store %arg7[%c16_26, %c256_27], %30 {strides = array<i32>} : memref<144x512xbf16, #tpu.memory_space<vmem>>, vector<16x256xbf16>,
    %c0_28 = arith.constant 0 : index
    %c113 = arith.constant 113 : index
    %32 = vector.load %arg6[%c0_28, %c113] : memref<16x1024xf32, #tpu.memory_space<vmem>>, vector<16x256xf32>
    %33 = vector.broadcast %1 : vector<1x256xf32> to vector<16x256xf32>
    %34 = arith.mulf %32, %33 : vector<16x256xf32>
    %35 = arith.truncf %34 : vector<16x256xf32> to vector<16x256xbf16>
    %c32 = arith.constant 32 : index
    %c0_29 = arith.constant 0 : index
    %36 = vector.load %arg7[%c32, %c0_29] : memref<144x512xbf16, #tpu.memory_space<vmem>>, vector<16x256xbf16>
    tpu.vector_store %arg7[%c32, %c0_29], %35 {strides = array<i32>} : memref<144x512xbf16, #tpu.memory_space<vmem>>, vector<16x256xbf16>,
    %c0_30 = arith.constant 0 : index
    %c625 = arith.constant 625 : index
    %37 = vector.load %arg6[%c0_30, %c625] : memref<16x1024xf32, #tpu.memory_space<vmem>>, vector<16x256xf32>
    %38 = vector.broadcast %1 : vector<1x256xf32> to vector<16x256xf32>
    %39 = arith.mulf %37, %38 : vector<16x256xf32>
    %40 = arith.truncf %39 : vector<16x256xf32> to vector<16x256xbf16>
    %c32_31 = arith.constant 32 : index
    %c256_32 = arith.constant 256 : index
    %41 = vector.load %arg7[%c32_31, %c256_32] : memref<144x512xbf16, #tpu.memory_space<vmem>>, vector<16x256xbf16>
    tpu.vector_store %arg7[%c32_31, %c256_32], %40 {strides = array<i32>} : memref<144x512xbf16, #tpu.memory_space<vmem>>, vector<16x256xbf16>,
    %c0_33 = arith.constant 0 : index
    %c127 = arith.constant 127 : index
    %42 = vector.load %arg6[%c0_33, %c127] : memref<16x1024xf32, #tpu.memory_space<vmem>>, vector<16x256xf32>
    %43 = vector.broadcast %0 : vector<1x256xf32> to vector<16x256xf32>
    %44 = arith.mulf %42, %43 : vector<16x256xf32>
    %45 = arith.truncf %44 : vector<16x256xf32> to vector<16x256xbf16>
    %c48 = arith.constant 48 : index
    %c0_34 = arith.constant 0 : index
    %46 = vector.load %arg7[%c48, %c0_34] : memref<144x512xbf16, #tpu.memory_space<vmem>>, vector<16x256xbf16>
    tpu.vector_store %arg7[%c48, %c0_34], %45 {strides = array<i32>} : memref<144x512xbf16, #tpu.memory_space<vmem>>, vector<16x256xbf16>,
    %c0_35 = arith.constant 0 : index
    %c639 = arith.constant 639 : index
    %47 = vector.load %arg6[%c0_35, %c639] : memref<16x1024xf32, #tpu.memory_space<vmem>>, vector<16x256xf32>
    %48 = vector.broadcast %0 : vector<1x256xf32> to vector<16x256xf32>
    %49 = arith.mulf %47, %48 : vector<16x256xf32>
    %50 = arith.truncf %49 : vector<16x256xf32> to vector<16x256xbf16>
    %c48_36 = arith.constant 48 : index
    %c256_37 = arith.constant 256 : index
    %51 = vector.load %arg7[%c48_36, %c256_37] : memref<144x512xbf16, #tpu.memory_space<vmem>>, vector<16x256xbf16>
    tpu.vector_store %arg7[%c48_36, %c256_37], %50 {strides = array<i32>} : memref<144x512xbf16, #tpu.memory_space<vmem>>, vector<16x256xbf16>,
    %c0_38 = arith.constant 0 : index
    %c128_39 = arith.constant 128 : index
    %52 = vector.load %arg6[%c0_38, %c128_39] : memref<16x1024xf32, #tpu.memory_space<vmem>>, vector<16x256xf32>
    %53 = arith.truncf %52 : vector<16x256xf32> to vector<16x256xbf16>
    %c64 = arith.constant 64 : index
    %c0_40 = arith.constant 0 : index
    %54 = vector.load %arg7[%c64, %c0_40] : memref<144x512xbf16, #tpu.memory_space<vmem>>, vector<16x256xbf16>
    tpu.vector_store %arg7[%c64, %c0_40], %53 {strides = array<i32>} : memref<144x512xbf16, #tpu.memory_space<vmem>>, vector<16x256xbf16>,
    %c0_41 = arith.constant 0 : index
    %c640_42 = arith.constant 640 : index
    %55 = vector.load %arg6[%c0_41, %c640_42] : memref<16x1024xf32, #tpu.memory_space<vmem>>, vector<16x256xf32>
    %56 = arith.truncf %55 : vector<16x256xf32> to vector<16x256xbf16>
    %c64_43 = arith.constant 64 : index
    %c256_44 = arith.constant 256 : index
    %57 = vector.load %arg7[%c64_43, %c256_44] : memref<144x512xbf16, #tpu.memory_space<vmem>>, vector<16x256xbf16>
    tpu.vector_store %arg7[%c64_43, %c256_44], %56 {strides = array<i32>} : memref<144x512xbf16, #tpu.memory_space<vmem>>, vector<16x256xbf16>,
    %c0_45 = arith.constant 0 : index
    %c129 = arith.constant 129 : index
    %58 = vector.load %arg6[%c0_45, %c129] : memref<16x1024xf32, #tpu.memory_space<vmem>>, vector<16x256xf32>
    %59 = vector.broadcast %1 : vector<1x256xf32> to vector<16x256xf32>
    %60 = arith.mulf %58, %59 : vector<16x256xf32>
    %61 = arith.truncf %60 : vector<16x256xf32> to vector<16x256xbf16>
    %c80 = arith.constant 80 : index
    %c0_46 = arith.constant 0 : index
    %62 = vector.load %arg7[%c80, %c0_46] : memref<144x512xbf16, #tpu.memory_space<vmem>>, vector<16x256xbf16>
    tpu.vector_store %arg7[%c80, %c0_46], %61 {strides = array<i32>} : memref<144x512xbf16, #tpu.memory_space<vmem>>, vector<16x256xbf16>,
    %c0_47 = arith.constant 0 : index
    %c641 = arith.constant 641 : index
    %63 = vector.load %arg6[%c0_47, %c641] : memref<16x1024xf32, #tpu.memory_space<vmem>>, vector<16x256xf32>
    %64 = vector.broadcast %1 : vector<1x256xf32> to vector<16x256xf32>
    %65 = arith.mulf %63, %64 : vector<16x256xf32>
    %66 = arith.truncf %65 : vector<16x256xf32> to vector<16x256xbf16>
    %c80_48 = arith.constant 80 : index
    %c256_49 = arith.constant 256 : index
    %67 = vector.load %arg7[%c80_48, %c256_49] : memref<144x512xbf16, #tpu.memory_space<vmem>>, vector<16x256xbf16>
    tpu.vector_store %arg7[%c80_48, %c256_49], %66 {strides = array<i32>} : memref<144x512xbf16, #tpu.memory_space<vmem>>, vector<16x256xbf16>,
    %c0_50 = arith.constant 0 : index
    %c143 = arith.constant 143 : index
    %68 = vector.load %arg6[%c0_50, %c143] : memref<16x1024xf32, #tpu.memory_space<vmem>>, vector<16x256xf32>
    %69 = vector.broadcast %0 : vector<1x256xf32> to vector<16x256xf32>
    %70 = arith.mulf %68, %69 : vector<16x256xf32>
    %71 = arith.truncf %70 : vector<16x256xf32> to vector<16x256xbf16>
    %c96 = arith.constant 96 : index
    %c0_51 = arith.constant 0 : index
    %72 = vector.load %arg7[%c96, %c0_51] : memref<144x512xbf16, #tpu.memory_space<vmem>>, vector<16x256xbf16>
    tpu.vector_store %arg7[%c96, %c0_51], %71 {strides = array<i32>} : memref<144x512xbf16, #tpu.memory_space<vmem>>, vector<16x256xbf16>,
    %c0_52 = arith.constant 0 : index
    %c655 = arith.constant 655 : index
    %73 = vector.load %arg6[%c0_52, %c655] : memref<16x1024xf32, #tpu.memory_space<vmem>>, vector<16x256xf32>
    %74 = vector.broadcast %0 : vector<1x256xf32> to vector<16x256xf32>
    %75 = arith.mulf %73, %74 : vector<16x256xf32>
    %76 = arith.truncf %75 : vector<16x256xf32> to vector<16x256xbf16>
    %c96_53 = arith.constant 96 : index
    %c256_54 = arith.constant 256 : index
    %77 = vector.load %arg7[%c96_53, %c256_54] : memref<144x512xbf16, #tpu.memory_space<vmem>>, vector<16x256xbf16>
    tpu.vector_store %arg7[%c96_53, %c256_54], %76 {strides = array<i32>} : memref<144x512xbf16, #tpu.memory_space<vmem>>, vector<16x256xbf16>,
    %c0_55 = arith.constant 0 : index
    %c144 = arith.constant 144 : index
    %78 = vector.load %arg6[%c0_55, %c144] : memref<16x1024xf32, #tpu.memory_space<vmem>>, vector<16x256xf32>
    %79 = arith.truncf %78 : vector<16x256xf32> to vector<16x256xbf16>
    %c112_56 = arith.constant 112 : index
    %c0_57 = arith.constant 0 : index
    %80 = vector.load %arg7[%c112_56, %c0_57] : memref<144x512xbf16, #tpu.memory_space<vmem>>, vector<16x256xbf16>
    tpu.vector_store %arg7[%c112_56, %c0_57], %79 {strides = array<i32>} : memref<144x512xbf16, #tpu.memory_space<vmem>>, vector<16x256xbf16>,
    %c0_58 = arith.constant 0 : index
    %c656 = arith.constant 656 : index
    %81 = vector.load %arg6[%c0_58, %c656] : memref<16x1024xf32, #tpu.memory_space<vmem>>, vector<16x256xf32>
    %82 = arith.truncf %81 : vector<16x256xf32> to vector<16x256xbf16>
    %c112_59 = arith.constant 112 : index
    %c256_60 = arith.constant 256 : index
    %83 = vector.load %arg7[%c112_59, %c256_60] : memref<144x512xbf16, #tpu.memory_space<vmem>>, vector<16x256xbf16>
    tpu.vector_store %arg7[%c112_59, %c256_60], %82 {strides = array<i32>} : memref<144x512xbf16, #tpu.memory_space<vmem>>, vector<16x256xbf16>,
    %c0_61 = arith.constant 0 : index
    %c145 = arith.constant 145 : index
    %84 = vector.load %arg6[%c0_61, %c145] : memref<16x1024xf32, #tpu.memory_space<vmem>>, vector<16x256xf32>
    %85 = vector.broadcast %1 : vector<1x256xf32> to vector<16x256xf32>
    %86 = arith.mulf %84, %85 : vector<16x256xf32>
    %87 = arith.truncf %86 : vector<16x256xf32> to vector<16x256xbf16>
    %c128_62 = arith.constant 128 : index
    %c0_63 = arith.constant 0 : index
    %88 = vector.load %arg7[%c128_62, %c0_63] : memref<144x512xbf16, #tpu.memory_space<vmem>>, vector<16x256xbf16>
    tpu.vector_store %arg7[%c128_62, %c0_63], %87 {strides = array<i32>} : memref<144x512xbf16, #tpu.memory_space<vmem>>, vector<16x256xbf16>,
    %c0_64 = arith.constant 0 : index
    %c657 = arith.constant 657 : index
    %89 = vector.load %arg6[%c0_64, %c657] : memref<16x1024xf32, #tpu.memory_space<vmem>>, vector<16x256xf32>
    %90 = vector.broadcast %1 : vector<1x256xf32> to vector<16x256xf32>
    %91 = arith.mulf %89, %90 : vector<16x256xf32>
    %92 = arith.truncf %91 : vector<16x256xf32> to vector<16x256xbf16>
    %c128_65 = arith.constant 128 : index
    %c256_66 = arith.constant 256 : index
    %93 = vector.load %arg7[%c128_65, %c256_66] : memref<144x512xbf16, #tpu.memory_space<vmem>>, vector<16x256xbf16>
    tpu.vector_store %arg7[%c128_65, %c256_66], %92 {strides = array<i32>} : memref<144x512xbf16, #tpu.memory_space<vmem>>, vector<16x256xbf16>,
    %c0_67 = arith.constant 0 : index
    %c0_68 = arith.constant 0 : index
    %94 = vector.load %arg2[%c0_67, %c0_68] : memref<32x144xbf16, #tpu.memory_space<vmem>>, vector<32x144xbf16>
    %c0_69 = arith.constant 0 : index
    %c0_70 = arith.constant 0 : index
    %95 = vector.load %arg7[%c0_69, %c0_70] : memref<144x512xbf16, #tpu.memory_space<vmem>>, vector<144x512xbf16>
    %cst_71 = arith.constant dense<0.000000e+00> : vector<32x512xf32>
    %96 = tpu.matmul %94, %95, %cst_71 {dimension_numbers = #tpu.dot_dimension_numbers<[1], [0], [0], [1], [0, 0, 1, 1], [], []>} : vector<32x144xbf16>, vector<144x512xbf16>, vector<32x512xf32> -> vector<32x512xf32>
    %97 = vector.extract_strided_slice %96 {offsets = [0, 0], sizes = [16, 512], strides = [1, 1]} : vector<32x512xf32> to vector<16x512xf32>
    %cst_72 = arith.constant 0.000000e+00 : f32
    %98 = vector.broadcast %cst_72 : f32 to vector<16x512xf32>
    %99 = arith.maximumf %97, %98 : vector<16x512xf32>
    %100 = vector.extract_strided_slice %96 {offsets = [16, 0], sizes = [16, 512], strides = [1, 1]} : vector<32x512xf32> to vector<16x512xf32>
    %101 = vector.extract_strided_slice %99 {offsets = [0, 0], sizes = [16, 256], strides = [1, 1]} : vector<16x512xf32> to vector<16x256xf32>
    %c0_73 = arith.constant 0 : index
    %c128_74 = arith.constant 128 : index
    %102 = vector.load %arg6[%c0_73, %c128_74] : memref<16x1024xf32, #tpu.memory_space<vmem>>, vector<16x256xf32>
    tpu.vector_store %arg6[%c0_73, %c128_74], %101 {strides = array<i32>} : memref<16x1024xf32, #tpu.memory_space<vmem>>, vector<16x256xf32>,
    %103 = vector.extract_strided_slice %99 {offsets = [0, 256], sizes = [16, 256], strides = [1, 1]} : vector<16x512xf32> to vector<16x256xf32>
    %c0_75 = arith.constant 0 : index
    %c640_76 = arith.constant 640 : index
    %104 = vector.load %arg6[%c0_75, %c640_76] : memref<16x1024xf32, #tpu.memory_space<vmem>>, vector<16x256xf32>
    tpu.vector_store %arg6[%c0_75, %c640_76], %103 {strides = array<i32>} : memref<16x1024xf32, #tpu.memory_space<vmem>>, vector<16x256xf32>,
    %c0_77 = arith.constant 0 : index
    %c111_78 = arith.constant 111 : index
    %105 = vector.load %arg6[%c0_77, %c111_78] : memref<16x1024xf32, #tpu.memory_space<vmem>>, vector<16x256xf32>
    %106 = vector.broadcast %0 : vector<1x256xf32> to vector<16x256xf32>
    %107 = arith.mulf %105, %106 : vector<16x256xf32>
    %108 = arith.truncf %107 : vector<16x256xf32> to vector<16x256xbf16>
    %c0_79 = arith.constant 0 : index
    %c0_80 = arith.constant 0 : index
    %109 = vector.load %arg7[%c0_79, %c0_80] : memref<144x512xbf16, #tpu.memory_space<vmem>>, vector<16x256xbf16>
    tpu.vector_store %arg7[%c0_79, %c0_80], %108 {strides = array<i32>} : memref<144x512xbf16, #tpu.memory_space<vmem>>, vector<16x256xbf16>,
    %c0_81 = arith.constant 0 : index
    %c623_82 = arith.constant 623 : index
    %110 = vector.load %arg6[%c0_81, %c623_82] : memref<16x1024xf32, #tpu.memory_space<vmem>>, vector<16x256xf32>
    %111 = vector.broadcast %0 : vector<1x256xf32> to vector<16x256xf32>
    %112 = arith.mulf %110, %111 : vector<16x256xf32>
    %113 = arith.truncf %112 : vector<16x256xf32> to vector<16x256xbf16>
    %c0_83 = arith.constant 0 : index
    %c256_84 = arith.constant 256 : index
    %114 = vector.load %arg7[%c0_83, %c256_84] : memref<144x512xbf16, #tpu.memory_space<vmem>>, vector<16x256xbf16>
    tpu.vector_store %arg7[%c0_83, %c256_84], %113 {strides = array<i32>} : memref<144x512xbf16, #tpu.memory_space<vmem>>, vector<16x256xbf16>,
    %c0_85 = arith.constant 0 : index
    %c112_86 = arith.constant 112 : index
    %115 = vector.load %arg6[%c0_85, %c112_86] : memref<16x1024xf32, #tpu.memory_space<vmem>>, vector<16x256xf32>
    %116 = arith.truncf %115 : vector<16x256xf32> to vector<16x256xbf16>
    %c16_87 = arith.constant 16 : index
    %c0_88 = arith.constant 0 : index
    %117 = vector.load %arg7[%c16_87, %c0_88] : memref<144x512xbf16, #tpu.memory_space<vmem>>, vector<16x256xbf16>
    tpu.vector_store %arg7[%c16_87, %c0_88], %116 {strides = array<i32>} : memref<144x512xbf16, #tpu.memory_space<vmem>>, vector<16x256xbf16>,
    %c0_89 = arith.constant 0 : index
    %c624_90 = arith.constant 624 : index
    %118 = vector.load %arg6[%c0_89, %c624_90] : memref<16x1024xf32, #tpu.memory_space<vmem>>, vector<16x256xf32>
    %119 = arith.truncf %118 : vector<16x256xf32> to vector<16x256xbf16>
    %c16_91 = arith.constant 16 : index
    %c256_92 = arith.constant 256 : index
    %120 = vector.load %arg7[%c16_91, %c256_92] : memref<144x512xbf16, #tpu.memory_space<vmem>>, vector<16x256xbf16>
    tpu.vector_store %arg7[%c16_91, %c256_92], %119 {strides = array<i32>} : memref<144x512xbf16, #tpu.memory_space<vmem>>, vector<16x256xbf16>,
    %c0_93 = arith.constant 0 : index
    %c113_94 = arith.constant 113 : index
    %121 = vector.load %arg6[%c0_93, %c113_94] : memref<16x1024xf32, #tpu.memory_space<vmem>>, vector<16x256xf32>
    %122 = vector.broadcast %1 : vector<1x256xf32> to vector<16x256xf32>
    %123 = arith.mulf %121, %122 : vector<16x256xf32>
    %124 = arith.truncf %123 : vector<16x256xf32> to vector<16x256xbf16>
    %c32_95 = arith.constant 32 : index
    %c0_96 = arith.constant 0 : index
    %125 = vector.load %arg7[%c32_95, %c0_96] : memref<144x512xbf16, #tpu.memory_space<vmem>>, vector<16x256xbf16>
    tpu.vector_store %arg7[%c32_95, %c0_96], %124 {strides = array<i32>} : memref<144x512xbf16, #tpu.memory_space<vmem>>, vector<16x256xbf16>,
    %c0_97 = arith.constant 0 : index
    %c625_98 = arith.constant 625 : index
    %126 = vector.load %arg6[%c0_97, %c625_98] : memref<16x1024xf32, #tpu.memory_space<vmem>>, vector<16x256xf32>
    %127 = vector.broadcast %1 : vector<1x256xf32> to vector<16x256xf32>
    %128 = arith.mulf %126, %127 : vector<16x256xf32>
    %129 = arith.truncf %128 : vector<16x256xf32> to vector<16x256xbf16>
    %c32_99 = arith.constant 32 : index
    %c256_100 = arith.constant 256 : index
    %130 = vector.load %arg7[%c32_99, %c256_100] : memref<144x512xbf16, #tpu.memory_space<vmem>>, vector<16x256xbf16>
    tpu.vector_store %arg7[%c32_99, %c256_100], %129 {strides = array<i32>} : memref<144x512xbf16, #tpu.memory_space<vmem>>, vector<16x256xbf16>,
    %c0_101 = arith.constant 0 : index
    %c127_102 = arith.constant 127 : index
    %131 = vector.load %arg6[%c0_101, %c127_102] : memref<16x1024xf32, #tpu.memory_space<vmem>>, vector<16x256xf32>
    %132 = vector.broadcast %0 : vector<1x256xf32> to vector<16x256xf32>
    %133 = arith.mulf %131, %132 : vector<16x256xf32>
    %134 = arith.truncf %133 : vector<16x256xf32> to vector<16x256xbf16>
    %c48_103 = arith.constant 48 : index
    %c0_104 = arith.constant 0 : index
    %135 = vector.load %arg7[%c48_103, %c0_104] : memref<144x512xbf16, #tpu.memory_space<vmem>>, vector<16x256xbf16>
    tpu.vector_store %arg7[%c48_103, %c0_104], %134 {strides = array<i32>} : memref<144x512xbf16, #tpu.memory_space<vmem>>, vector<16x256xbf16>,
    %c0_105 = arith.constant 0 : index
    %c639_106 = arith.constant 639 : index
    %136 = vector.load %arg6[%c0_105, %c639_106] : memref<16x1024xf32, #tpu.memory_space<vmem>>, vector<16x256xf32>
    %137 = vector.broadcast %0 : vector<1x256xf32> to vector<16x256xf32>
    %138 = arith.mulf %136, %137 : vector<16x256xf32>
    %139 = arith.truncf %138 : vector<16x256xf32> to vector<16x256xbf16>
    %c48_107 = arith.constant 48 : index
    %c256_108 = arith.constant 256 : index
    %140 = vector.load %arg7[%c48_107, %c256_108] : memref<144x512xbf16, #tpu.memory_space<vmem>>, vector<16x256xbf16>
    tpu.vector_store %arg7[%c48_107, %c256_108], %139 {strides = array<i32>} : memref<144x512xbf16, #tpu.memory_space<vmem>>, vector<16x256xbf16>,
    %c0_109 = arith.constant 0 : index
    %c128_110 = arith.constant 128 : index
    %141 = vector.load %arg6[%c0_109, %c128_110] : memref<16x1024xf32, #tpu.memory_space<vmem>>, vector<16x256xf32>
    %142 = arith.truncf %141 : vector<16x256xf32> to vector<16x256xbf16>
    %c64_111 = arith.constant 64 : index
    %c0_112 = arith.constant 0 : index
    %143 = vector.load %arg7[%c64_111, %c0_112] : memref<144x512xbf16, #tpu.memory_space<vmem>>, vector<16x256xbf16>
    tpu.vector_store %arg7[%c64_111, %c0_112], %142 {strides = array<i32>} : memref<144x512xbf16, #tpu.memory_space<vmem>>, vector<16x256xbf16>,
    %c0_113 = arith.constant 0 : index
    %c640_114 = arith.constant 640 : index
    %144 = vector.load %arg6[%c0_113, %c640_114] : memref<16x1024xf32, #tpu.memory_space<vmem>>, vector<16x256xf32>
    %145 = arith.truncf %144 : vector<16x256xf32> to vector<16x256xbf16>
    %c64_115 = arith.constant 64 : index
    %c256_116 = arith.constant 256 : index
    %146 = vector.load %arg7[%c64_115, %c256_116] : memref<144x512xbf16, #tpu.memory_space<vmem>>, vector<16x256xbf16>
    tpu.vector_store %arg7[%c64_115, %c256_116], %145 {strides = array<i32>} : memref<144x512xbf16, #tpu.memory_space<vmem>>, vector<16x256xbf16>,
    %c0_117 = arith.constant 0 : index
    %c129_118 = arith.constant 129 : index
    %147 = vector.load %arg6[%c0_117, %c129_118] : memref<16x1024xf32, #tpu.memory_space<vmem>>, vector<16x256xf32>
    %148 = vector.broadcast %1 : vector<1x256xf32> to vector<16x256xf32>
    %149 = arith.mulf %147, %148 : vector<16x256xf32>
    %150 = arith.truncf %149 : vector<16x256xf32> to vector<16x256xbf16>
    %c80_119 = arith.constant 80 : index
    %c0_120 = arith.constant 0 : index
    %151 = vector.load %arg7[%c80_119, %c0_120] : memref<144x512xbf16, #tpu.memory_space<vmem>>, vector<16x256xbf16>
    tpu.vector_store %arg7[%c80_119, %c0_120], %150 {strides = array<i32>} : memref<144x512xbf16, #tpu.memory_space<vmem>>, vector<16x256xbf16>,
    %c0_121 = arith.constant 0 : index
    %c641_122 = arith.constant 641 : index
    %152 = vector.load %arg6[%c0_121, %c641_122] : memref<16x1024xf32, #tpu.memory_space<vmem>>, vector<16x256xf32>
    %153 = vector.broadcast %1 : vector<1x256xf32> to vector<16x256xf32>
    %154 = arith.mulf %152, %153 : vector<16x256xf32>
    %155 = arith.truncf %154 : vector<16x256xf32> to vector<16x256xbf16>
    %c80_123 = arith.constant 80 : index
    %c256_124 = arith.constant 256 : index
    %156 = vector.load %arg7[%c80_123, %c256_124] : memref<144x512xbf16, #tpu.memory_space<vmem>>, vector<16x256xbf16>
    tpu.vector_store %arg7[%c80_123, %c256_124], %155 {strides = array<i32>} : memref<144x512xbf16, #tpu.memory_space<vmem>>, vector<16x256xbf16>,
    %c0_125 = arith.constant 0 : index
    %c143_126 = arith.constant 143 : index
    %157 = vector.load %arg6[%c0_125, %c143_126] : memref<16x1024xf32, #tpu.memory_space<vmem>>, vector<16x256xf32>
    %158 = vector.broadcast %0 : vector<1x256xf32> to vector<16x256xf32>
    %159 = arith.mulf %157, %158 : vector<16x256xf32>
    %160 = arith.truncf %159 : vector<16x256xf32> to vector<16x256xbf16>
    %c96_127 = arith.constant 96 : index
    %c0_128 = arith.constant 0 : index
    %161 = vector.load %arg7[%c96_127, %c0_128] : memref<144x512xbf16, #tpu.memory_space<vmem>>, vector<16x256xbf16>
    tpu.vector_store %arg7[%c96_127, %c0_128], %160 {strides = array<i32>} : memref<144x512xbf16, #tpu.memory_space<vmem>>, vector<16x256xbf16>,
    %c0_129 = arith.constant 0 : index
    %c655_130 = arith.constant 655 : index
    %162 = vector.load %arg6[%c0_129, %c655_130] : memref<16x1024xf32, #tpu.memory_space<vmem>>, vector<16x256xf32>
    %163 = vector.broadcast %0 : vector<1x256xf32> to vector<16x256xf32>
    %164 = arith.mulf %162, %163 : vector<16x256xf32>
    %165 = arith.truncf %164 : vector<16x256xf32> to vector<16x256xbf16>
    %c96_131 = arith.constant 96 : index
    %c256_132 = arith.constant 256 : index
    %166 = vector.load %arg7[%c96_131, %c256_132] : memref<144x512xbf16, #tpu.memory_space<vmem>>, vector<16x256xbf16>
    tpu.vector_store %arg7[%c96_131, %c256_132], %165 {strides = array<i32>} : memref<144x512xbf16, #tpu.memory_space<vmem>>, vector<16x256xbf16>,
    %c0_133 = arith.constant 0 : index
    %c144_134 = arith.constant 144 : index
    %167 = vector.load %arg6[%c0_133, %c144_134] : memref<16x1024xf32, #tpu.memory_space<vmem>>, vector<16x256xf32>
    %168 = arith.truncf %167 : vector<16x256xf32> to vector<16x256xbf16>
    %c112_135 = arith.constant 112 : index
    %c0_136 = arith.constant 0 : index
    %169 = vector.load %arg7[%c112_135, %c0_136] : memref<144x512xbf16, #tpu.memory_space<vmem>>, vector<16x256xbf16>
    tpu.vector_store %arg7[%c112_135, %c0_136], %168 {strides = array<i32>} : memref<144x512xbf16, #tpu.memory_space<vmem>>, vector<16x256xbf16>,
    %c0_137 = arith.constant 0 : index
    %c656_138 = arith.constant 656 : index
    %170 = vector.load %arg6[%c0_137, %c656_138] : memref<16x1024xf32, #tpu.memory_space<vmem>>, vector<16x256xf32>
    %171 = arith.truncf %170 : vector<16x256xf32> to vector<16x256xbf16>
    %c112_139 = arith.constant 112 : index
    %c256_140 = arith.constant 256 : index
    %172 = vector.load %arg7[%c112_139, %c256_140] : memref<144x512xbf16, #tpu.memory_space<vmem>>, vector<16x256xbf16>
    tpu.vector_store %arg7[%c112_139, %c256_140], %171 {strides = array<i32>} : memref<144x512xbf16, #tpu.memory_space<vmem>>, vector<16x256xbf16>,
    %c0_141 = arith.constant 0 : index
    %c145_142 = arith.constant 145 : index
    %173 = vector.load %arg6[%c0_141, %c145_142] : memref<16x1024xf32, #tpu.memory_space<vmem>>, vector<16x256xf32>
    %174 = vector.broadcast %1 : vector<1x256xf32> to vector<16x256xf32>
    %175 = arith.mulf %173, %174 : vector<16x256xf32>
    %176 = arith.truncf %175 : vector<16x256xf32> to vector<16x256xbf16>
    %c128_143 = arith.constant 128 : index
    %c0_144 = arith.constant 0 : index
    %177 = vector.load %arg7[%c128_143, %c0_144] : memref<144x512xbf16, #tpu.memory_space<vmem>>, vector<16x256xbf16>
    tpu.vector_store %arg7[%c128_143, %c0_144], %176 {strides = array<i32>} : memref<144x512xbf16, #tpu.memory_space<vmem>>, vector<16x256xbf16>,
    %c0_145 = arith.constant 0 : index
    %c657_146 = arith.constant 657 : index
    %178 = vector.load %arg6[%c0_145, %c657_146] : memref<16x1024xf32, #tpu.memory_space<vmem>>, vector<16x256xf32>
    %179 = vector.broadcast %1 : vector<1x256xf32> to vector<16x256xf32>
    %180 = arith.mulf %178, %179 : vector<16x256xf32>
    %181 = arith.truncf %180 : vector<16x256xf32> to vector<16x256xbf16>
    %c128_147 = arith.constant 128 : index
    %c256_148 = arith.constant 256 : index
    %182 = vector.load %arg7[%c128_147, %c256_148] : memref<144x512xbf16, #tpu.memory_space<vmem>>, vector<16x256xbf16>
    tpu.vector_store %arg7[%c128_147, %c256_148], %181 {strides = array<i32>} : memref<144x512xbf16, #tpu.memory_space<vmem>>, vector<16x256xbf16>,
    %c0_149 = arith.constant 0 : index
    %c0_150 = arith.constant 0 : index
    %183 = vector.load %arg3[%c0_149, %c0_150] : memref<16x144xbf16, #tpu.memory_space<vmem>>, vector<16x144xbf16>
    %c0_151 = arith.constant 0 : index
    %c0_152 = arith.constant 0 : index
    %184 = vector.load %arg7[%c0_151, %c0_152] : memref<144x512xbf16, #tpu.memory_space<vmem>>, vector<144x512xbf16>
    %cst_153 = arith.constant dense<0.000000e+00> : vector<16x512xf32>
    %185 = tpu.matmul %183, %184, %cst_153 {dimension_numbers = #tpu.dot_dimension_numbers<[1], [0], [0], [1], [0, 0, 1, 1], [], []>} : vector<16x144xbf16>, vector<144x512xbf16>, vector<16x512xf32> -> vector<16x512xf32>
    %186 = arith.addf %185, %100 : vector<16x512xf32>
    %cst_154 = arith.constant 0.000000e+00 : f32
    %187 = vector.broadcast %cst_154 : f32 to vector<16x512xf32>
    %188 = arith.maximumf %186, %187 : vector<16x512xf32>
    %189 = vector.extract_strided_slice %188 {offsets = [0, 0], sizes = [8, 256], strides = [1, 1]} : vector<16x512xf32> to vector<8x256xf32>
    %c0_155 = arith.constant 0 : index
    %c0_156 = arith.constant 0 : index
    %c0_157 = arith.constant 0 : index
    %190 = vector.load %arg5[%c0_155, %c0_156, %c0_157] : memref<2x8x256xf32, #tpu.memory_space<vmem>>, vector<1x8x256xf32>
    %191 = vector.shape_cast %190 : vector<1x8x256xf32> to vector<8x256xf32>
    %192 = vector.shape_cast %189 : vector<8x256xf32> to vector<1x8x256xf32>
    tpu.vector_store %arg5[%c0_155, %c0_156, %c0_157], %192 {strides = array<i32>} : memref<2x8x256xf32, #tpu.memory_space<vmem>>, vector<1x8x256xf32>,
    %193 = vector.extract_strided_slice %188 {offsets = [0, 256], sizes = [8, 256], strides = [1, 1]} : vector<16x512xf32> to vector<8x256xf32>
    %c1_158 = arith.constant 1 : index
    %c0_159 = arith.constant 0 : index
    %c0_160 = arith.constant 0 : index
    %194 = vector.load %arg5[%c1_158, %c0_159, %c0_160] : memref<2x8x256xf32, #tpu.memory_space<vmem>>, vector<1x8x256xf32>
    %195 = vector.shape_cast %194 : vector<1x8x256xf32> to vector<8x256xf32>
    %196 = vector.shape_cast %193 : vector<8x256xf32> to vector<1x8x256xf32>
    tpu.vector_store %arg5[%c1_158, %c0_159, %c0_160], %196 {strides = array<i32>} : memref<2x8x256xf32, #tpu.memory_space<vmem>>, vector<1x8x256xf32>,
    return
  }
  func.func @transform_0(%arg0: i32) -> (i32, i32, i32) {
    %c0_i32 = arith.constant 0 : i32
    %c0_i32_0 = arith.constant 0 : i32
    %c0_i32_1 = arith.constant 0 : i32
    return %arg0, %c0_i32, %c0_i32_0 : i32, i32, i32
  }
  func.func @transform_1(%arg0: i32) -> (i32, i32) {
    %c0_i32 = arith.constant 0 : i32
    %c0_i32_0 = arith.constant 0 : i32
    %c0_i32_1 = arith.constant 0 : i32
    return %c0_i32, %c0_i32_0 : i32, i32
  }
  func.func @transform_2(%arg0: i32) -> (i32, i32) {
    %c0_i32 = arith.constant 0 : i32
    %c0_i32_0 = arith.constant 0 : i32
    %c0_i32_1 = arith.constant 0 : i32
    return %c0_i32, %c0_i32_0 : i32, i32
  }
  func.func @transform_3(%arg0: i32) -> (i32, i32) {
    %c0_i32 = arith.constant 0 : i32
    %c0_i32_0 = arith.constant 0 : i32
    %c0_i32_1 = arith.constant 0 : i32
    return %c0_i32, %c0_i32_0 : i32, i32
  }
  func.func @transform_4(%arg0: i32) -> (i32, i32, i32) {
    %c0_i32 = arith.constant 0 : i32
    %c0_i32_0 = arith.constant 0 : i32
    %c0_i32_1 = arith.constant 0 : i32
    return %arg0, %c0_i32, %c0_i32_0 : i32, i32, i32
  }
}

</mosaic_0001>

<llo_original>
// kernel: tpu_custom_call.1
$region0: #{tpu_custom_call.1}
  #allocation0 [shape = 'u32[]', space=smem, size = 0x4, offset = 0x4, fixed_abs, tag = 'smem constant byte address 0x4 - core index']
  #allocation1 [shape = 'u32[144,128]{1,0:T(1,128)}', space=vmem, size = 0x12000, scoped, tag = 'internal scratch']
  #allocation2 [shape = 'f32[16,1024]{1,0:T(8,128)}', space=vmem, size = 0x10000, scoped, tag = 'scratch operand']
  #allocation3 [shape = 'bf16[144,512]{1,0:T(8,128)(2,1)}', space=vmem, size = 0x24000, scoped, tag = 'scratch operand']
  %s0 = inlined_call_operand.hbm [shape: f32[2,16,256], index: 0, kind: input, shape index: {}]
  %s1 = inlined_call_operand.hbm [shape: bf16[32,144], index: 1, kind: input, shape index: {}]
  %s2 = inlined_call_operand.hbm [shape: bf16[16,144], index: 2, kind: input, shape index: {}]
  %s3 = inlined_call_operand.vmem [shape: f32[2,256], index: 3, kind: input, shape index: {}]
  %s4 = inlined_call_operand.hbm [shape: f32[2,8,256], index: 4, kind: output, shape index: {}]
  %s5 = sld [smem:[#allocation0]]
  $region38: #{tpu_custom_call.1} parent=0
    _
  %s7 = ssub.s32 1, %s5
  %s8 = scalar_select 0, %s7, %s5
  $region1: #{tpu_custom_call.1} parent=0
    #allocation4 [shape = 'u8[32768]{0}', space=vmem, size = 0x8000, scoped, tag = 'input window, operand 0, single buffered']
    #allocation5 [shape = 's32[1]{0}', space=sflag, size = 0x4, scoped, tag = 'scoped memory for tpu_custom_call.1']
    #allocation6 [shape = 's32[1]{0}', space=sflag, size = 0x4, scoped, tag = 'scoped memory for tpu_custom_call.1']
    #allocation7 [shape = 'u8[16384]{0}', space=vmem, size = 0x4000, scoped, tag = 'input window, operand 1, single buffered']
    #allocation8 [shape = 's32[1]{0}', space=sflag, size = 0x4, scoped, tag = 'scoped memory for tpu_custom_call.1']
    #allocation9 [shape = 'u8[8192]{0}', space=vmem, size = 0x2000, scoped, tag = 'input window, operand 2, single buffered']
    #allocation10 [shape = 'u8[16384]{0}', space=vmem, size = 0x4000, scoped, tag = 'output window, operand 0, single buffered']
    %9 = vsyncpa [#allocation5], 0
    %10 = vsyncpa [#allocation8], 0
    %11 = vsyncpa [#allocation6], 0
    // Predicated region
    $region2: #{tpu_custom_call.1} parent=1 // pred_check
      _
    $region3: #{tpu_custom_call.1} parent=1 // pred_check_branch
      %13 = sbr.rel (0) target = $region5
    $region4: #{tpu_custom_call.1} parent=1 // pred_region
      %s15 = ssub.s32 1024, 1024
      %16 = vsyncadd [#allocation5], %s15
      %s17 = sshll.u32 [#allocation4], 4
      %s18 = int_to_ptr.vmem [resolvable:$true] %s17
      %23 = dma.hbm_to_vmem [thread:$0]  %s0, 1024, %s18, [#allocation5], 256, 256, 16
    $region5: #{tpu_custom_call.1} parent=1 // pred_fallthru
      _
    // Predicated region
    $region6: #{tpu_custom_call.1} parent=1 // pred_check
      _
    $region7: #{tpu_custom_call.1} parent=1 // pred_check_branch
      %25 = sbr.rel (0) target = $region9
    $region8: #{tpu_custom_call.1} parent=1 // pred_region
      %s27 = ssub.s32 512, 512
      %28 = vsyncadd [#allocation8], %s27
      %s29 = sshll.u32 [#allocation7], 4
      %s30 = int_to_ptr.vmem [resolvable:$true] %s29
      %35 = dma.hbm_to_vmem [thread:$0]  %s1, 512, %s30, [#allocation8], 128, 128, 8
    $region9: #{tpu_custom_call.1} parent=1 // pred_fallthru
      _
    // Predicated region
    $region10: #{tpu_custom_call.1} parent=1 // pred_check
      _
    $region11: #{tpu_custom_call.1} parent=1 // pred_check_branch
      %37 = sbr.rel (0) target = $region13
    $region12: #{tpu_custom_call.1} parent=1 // pred_region
      %s39 = ssub.s32 256, 256
      %40 = vsyncadd [#allocation8], %s39
      %s41 = sshll.u32 [#allocation9], 4
      %s42 = int_to_ptr.vmem [resolvable:$true] %s41
      %47 = dma.hbm_to_vmem [thread:$0]  %s2, 256, %s42, [#allocation8], 128, 128, 8
    $region13: #{tpu_custom_call.1} parent=1 // pred_fallthru
      _
    // Predicated region
    $region14: #{tpu_custom_call.1} parent=1 // pred_check
      _
    $region15: #{tpu_custom_call.1} parent=1 // pred_check_branch
      %49 = sbr.rel (0) target = $region17
    $region16: #{tpu_custom_call.1} parent=1 // pred_region
      _
    $region17: #{tpu_custom_call.1} parent=1 // pred_fallthru
      _
    // Predicated region
    $region18: #{tpu_custom_call.1} parent=1 // pred_check
      _
    $region19: #{tpu_custom_call.1} parent=1 // pred_check_branch
      %51 = sbr.rel (0) target = $region21
    $region20: #{tpu_custom_call.1} parent=1 // pred_region
      %52 = dma.done [#allocation5], 1024
    $region21: #{tpu_custom_call.1} parent=1 // pred_fallthru
      _
    // Predicated region
    $region22: #{tpu_custom_call.1} parent=1 // pred_check
      _
    $region23: #{tpu_custom_call.1} parent=1 // pred_check_branch
      %54 = sbr.rel (0) target = $region25
    $region24: #{tpu_custom_call.1} parent=1 // pred_region
      %55 = dma.done [#allocation8], 512
    $region25: #{tpu_custom_call.1} parent=1 // pred_fallthru
      _
    // Predicated region
    $region26: #{tpu_custom_call.1} parent=1 // pred_check
      _
    $region27: #{tpu_custom_call.1} parent=1 // pred_check_branch
      %57 = sbr.rel (0) target = $region29
    $region28: #{tpu_custom_call.1} parent=1 // pred_region
      %58 = dma.done [#allocation8], 256
    $region29: #{tpu_custom_call.1} parent=1 // pred_fallthru
      _
    %v60 = vld [vmem:[%s3] ss:$2 sm:$0x3]
    %s61 = scalar_lea.vmem %s3, 1
    %v62 = vld [vmem:[%s61] ss:$2 sm:$0x3]
    %63 = vst [vmem:[#allocation2] sm:$0xff] 0.0
    %64 = vst [vmem:[#allocation2 + $0x40] sm:$0xff] 0.0
    %65 = vst [vmem:[#allocation2 + $0x18] sm:$0xff] 0.0
    %66 = vst [vmem:[#allocation2 + $0x58] sm:$0xff] 0.0
    %67 = vst [vmem:[#allocation2 + $0x20] sm:$0xff] 0.0
    %68 = vst [vmem:[#allocation2 + $0x60] sm:$0xff] 0.0
    %69 = vst [vmem:[#allocation2 + $0x38] sm:$0xff] 0.0
    %70 = vst [vmem:[#allocation2 + $0x78] sm:$0xff] 0.0
    %v71 = vld [vmem:[#allocation4] sm:$0xff]
    %v72 = vld [vmem:[#allocation4 + $0x8] sm:$0xff]
    %v73 = vld [vmem:[#allocation4 + $0x10] sm:$0xff]
    %v74 = vld [vmem:[#allocation4 + $0x18] sm:$0xff]
    %75 = vst [vmem:[#allocation2 + $0x8] sm:$0xff] %v71
    %76 = vst [vmem:[#allocation2 + $0x10] sm:$0xff] %v72
    %77 = vst [vmem:[#allocation2 + $0x48] sm:$0xff] %v73
    %78 = vst [vmem:[#allocation2 + $0x50] sm:$0xff] %v74
    %s79 = scalar_lea.vmem [#allocation4], 32
    %v80 = vld [vmem:[%s79] sm:$0xff]
    %v81 = vld [vmem:[%s79 + $0x8] sm:$0xff]
    %v82 = vld [vmem:[%s79 + $0x10] sm:$0xff]
    %v83 = vld [vmem:[%s79 + $0x18] sm:$0xff]
    %84 = vst [vmem:[#allocation2 + $0x28] sm:$0xff] %v80
    %85 = vst [vmem:[#allocation2 + $0x30] sm:$0xff] %v81
    %86 = vst [vmem:[#allocation2 + $0x68] sm:$0xff] %v82
    %87 = vst [vmem:[#allocation2 + $0x70] sm:$0xff] %v83
    %v88 = vld [vmem:[#allocation2] sm:$0xff]
    %v89 = vld [vmem:[#allocation2 + $0x8] sm:$0xff]
    %v90 = vld [vmem:[#allocation2 + $0x10] sm:$0xff]
    %v91 = vld [vmem:[#allocation2 + $0x40] sm:$0xff]
    %v92 = vld [vmem:[#allocation2 + $0x48] sm:$0xff]
    %v93 = vld [vmem:[#allocation2 + $0x50] sm:$0xff]
    %v95 = vlaneseq
    %v96 = vshrl.u32 %v95, 7
    %v97 = vsub.s32 0, %v96
    %v98 = vrot.slane %v60, %v97
    %v99 = vlaneseq
    %v100 = vshrl.u32 %v99, 7
    %v101 = vsub.s32 1, %v100
    %v102 = vrot.slane %v60, %v101
    %103 = vrot.lane.b32.xlu0 %v98, 111
    %v104 = vpop.permute.xlu0 %103
    %105 = vrot.lane.b32.xlu0 %v102, 111
    %v106 = vpop.permute.xlu0 %105
    %vm107 = vcmask 908288
    %v108 = vsel %vm107, %v104, %v106
    %v112 = vmul.f32 %v88, %v104
    %v113 = vmul.f32 %v89, %v108
    %v114 = vmul.f32 %v90, %v106
    %v115 = vmul.f32 %v91, %v104
    %v116 = vmul.f32 %v92, %v108
    %v117 = vmul.f32 %v93, %v106
    %v118 = vpack.c.bf16 %v115, %v112
    %v119 = vpack.c.bf16 %v116, %v113
    %v120 = vpack.c.bf16 %v117, %v114
    %v124 = vunpack.c.l.b16 %v118
    %v125 = vunpack.c.l.b16 %v119
    %v126 = vunpack.c.l.b16 %v120
    %v127 = vunpack.c.h.b16 %v118
    %v128 = vunpack.c.h.b16 %v119
    %v129 = vunpack.c.h.b16 %v120
    %v130 = vpack.c.b16 %v125, %v124
    %v131 = vpack.c.b16 %v126, %v126
    %v132 = vpack.c.b16 %v128, %v127
    %v133 = vpack.c.b16 %v129, %v129
    %134 = vrot.lane.b32.xlu0 %v130, 17
    %v135 = vpop.permute.xlu0 %134
    %136 = vrot.lane.b32.xlu0 %v131, 17
    %v137 = vpop.permute.xlu0 %136
    %138 = vrot.lane.b32.xlu0 %v132, 17
    %v139 = vpop.permute.xlu0 %138
    %140 = vrot.lane.b32.xlu0 %v133, 17
    %v141 = vpop.permute.xlu0 %140
    %v142 = vrot.slane %v135, 4
    %v143 = vrot.slane %v137, 4
    %v144 = vrot.slane %v139, 4
    %v145 = vrot.slane %v141, 4
    %vm146 = vcmask 1043456
    %v147 = vsel %vm146, %v142, %v143
    %vm148 = vcmask 138240
    %v149 = vsel %vm148, %v135, %v147
    %v150 = vsel %vm146, %v144, %v145
    %v151 = vsel %vm148, %v139, %v150
    %154 = vst [vmem:[#allocation3] sm:$0xff] %v149
    %155 = vst [vmem:[#allocation3 + $0x10] sm:$0xff] %v151
    %v156 = vld [vmem:[#allocation2 + $0x20] sm:$0xff]
    %v157 = vld [vmem:[#allocation2 + $0x28] sm:$0xff]
    %v158 = vld [vmem:[#allocation2 + $0x30] sm:$0xff]
    %v159 = vld [vmem:[#allocation2 + $0x60] sm:$0xff]
    %v160 = vld [vmem:[#allocation2 + $0x68] sm:$0xff]
    %v161 = vld [vmem:[#allocation2 + $0x70] sm:$0xff]
    %v162 = vmul.f32 %v156, %v104
    %v163 = vmul.f32 %v157, %v108
    %v164 = vmul.f32 %v158, %v106
    %v165 = vmul.f32 %v159, %v104
    %v166 = vmul.f32 %v160, %v108
    %v167 = vmul.f32 %v161, %v106
    %v168 = vpack.c.bf16 %v165, %v162
    %v169 = vpack.c.bf16 %v166, %v163
    %v170 = vpack.c.bf16 %v167, %v164
    %v174 = vunpack.c.l.b16 %v168
    %v175 = vunpack.c.l.b16 %v169
    %v176 = vunpack.c.l.b16 %v170
    %v177 = vunpack.c.h.b16 %v168
    %v178 = vunpack.c.h.b16 %v169
    %v179 = vunpack.c.h.b16 %v170
    %v180 = vpack.c.b16 %v175, %v174
    %v181 = vpack.c.b16 %v176, %v176
    %v182 = vpack.c.b16 %v178, %v177
    %v183 = vpack.c.b16 %v179, %v179
    %184 = vrot.lane.b32.xlu0 %v180, 17
    %v185 = vpop.permute.xlu0 %184
    %186 = vrot.lane.b32.xlu0 %v181, 17
    %v187 = vpop.permute.xlu0 %186
    %188 = vrot.lane.b32.xlu0 %v182, 17
    %v189 = vpop.permute.xlu0 %188
    %190 = vrot.lane.b32.xlu0 %v183, 17
    %v191 = vpop.permute.xlu0 %190
    %v192 = vrot.slane %v185, 4
    %v193 = vrot.slane %v187, 4
    %v194 = vrot.slane %v189, 4
    %v195 = vrot.slane %v191, 4
    %v196 = vsel %vm146, %v192, %v193
    %v197 = vsel %vm148, %v185, %v196
    %v198 = vsel %vm146, %v194, %v195
    %v199 = vsel %vm148, %v189, %v198
    %202 = vst [vmem:[#allocation3 + $0x8] sm:$0xff] %v197
    %203 = vst [vmem:[#allocation3 + $0x18] sm:$0xff] %v199
    %v204 = vld [vmem:[#allocation2] sm:$0xff]
    %v205 = vld [vmem:[#allocation2 + $0x8] sm:$0xff]
    %v206 = vld [vmem:[#allocation2 + $0x10] sm:$0xff]
    %v207 = vld [vmem:[#allocation2 + $0x40] sm:$0xff]
    %v208 = vld [vmem:[#allocation2 + $0x48] sm:$0xff]
    %v209 = vld [vmem:[#allocation2 + $0x50] sm:$0xff]
    %v210 = vpack.c.bf16 %v207, %v204
    %v211 = vpack.c.bf16 %v208, %v205
    %v212 = vpack.c.bf16 %v209, %v206
    %v216 = vunpack.c.l.b16 %v210
    %v217 = vunpack.c.l.b16 %v211
    %v218 = vunpack.c.l.b16 %v212
    %v219 = vunpack.c.h.b16 %v210
    %v220 = vunpack.c.h.b16 %v211
    %v221 = vunpack.c.h.b16 %v212
    %v222 = vpack.c.b16 %v217, %v216
    %v223 = vpack.c.b16 %v218, %v218
    %v224 = vpack.c.b16 %v220, %v219
    %v225 = vpack.c.b16 %v221, %v221
    %226 = vrot.lane.b32.xlu0 %v222, 16
    %v227 = vpop.permute.xlu0 %226
    %228 = vrot.lane.b32.xlu0 %v223, 16
    %v229 = vpop.permute.xlu0 %228
    %230 = vrot.lane.b32.xlu0 %v224, 16
    %v231 = vpop.permute.xlu0 %230
    %232 = vrot.lane.b32.xlu0 %v225, 16
    %v233 = vpop.permute.xlu0 %232
    %v234 = vrot.slane %v227, 4
    %v235 = vrot.slane %v229, 4
    %v236 = vrot.slane %v231, 4
    %v237 = vrot.slane %v233, 4
    %v238 = vsel %vm146, %v234, %v235
    %vm239 = vcmask 130048
    %v240 = vsel %vm239, %v227, %v238
    %v241 = vsel %vm146, %v236, %v237
    %v242 = vsel %vm239, %v231, %v241
    %245 = vst [vmem:[#allocation3 + $0x20] sm:$0xff] %v240
    %246 = vst [vmem:[#allocation3 + $0x30] sm:$0xff] %v242
    %v247 = vld [vmem:[#allocation2 + $0x20] sm:$0xff]
    %v248 = vld [vmem:[#allocation2 + $0x28] sm:$0xff]
    %v249 = vld [vmem:[#allocation2 + $0x30] sm:$0xff]
    %v250 = vld [vmem:[#allocation2 + $0x60] sm:$0xff]
    %v251 = vld [vmem:[#allocation2 + $0x68] sm:$0xff]
    %v252 = vld [vmem:[#allocation2 + $0x70] sm:$0xff]
    %v253 = vpack.c.bf16 %v250, %v247
    %v254 = vpack.c.bf16 %v251, %v248
    %v255 = vpack.c.bf16 %v252, %v249
    %v259 = vunpack.c.l.b16 %v253
    %v260 = vunpack.c.l.b16 %v254
    %v261 = vunpack.c.l.b16 %v255
    %v262 = vunpack.c.h.b16 %v253
    %v263 = vunpack.c.h.b16 %v254
    %v264 = vunpack.c.h.b16 %v255
    %v265 = vpack.c.b16 %v260, %v259
    %v266 = vpack.c.b16 %v261, %v261
    %v267 = vpack.c.b16 %v263, %v262
    %v268 = vpack.c.b16 %v264, %v264
    %269 = vrot.lane.b32.xlu0 %v265, 16
    %v270 = vpop.permute.xlu0 %269
    %271 = vrot.lane.b32.xlu0 %v266, 16
    %v272 = vpop.permute.xlu0 %271
    %273 = vrot.lane.b32.xlu0 %v267, 16
    %v274 = vpop.permute.xlu0 %273
    %275 = vrot.lane.b32.xlu0 %v268, 16
    %v276 = vpop.permute.xlu0 %275
    %v277 = vrot.slane %v270, 4
    %v278 = vrot.slane %v272, 4
    %v279 = vrot.slane %v274, 4
    %v280 = vrot.slane %v276, 4
    %v281 = vsel %vm146, %v277, %v278
    %v282 = vsel %vm239, %v270, %v281
    %v283 = vsel %vm146, %v279, %v280
    %v284 = vsel %vm239, %v274, %v283
    %287 = vst [vmem:[#allocation3 + $0x28] sm:$0xff] %v282
    %288 = vst [vmem:[#allocation3 + $0x38] sm:$0xff] %v284
    %v289 = vld [vmem:[#allocation2] sm:$0xff]
    %v290 = vld [vmem:[#allocation2 + $0x8] sm:$0xff]
    %v291 = vld [vmem:[#allocation2 + $0x10] sm:$0xff]
    %v292 = vld [vmem:[#allocation2 + $0x40] sm:$0xff]
    %v293 = vld [vmem:[#allocation2 + $0x48] sm:$0xff]
    %v294 = vld [vmem:[#allocation2 + $0x50] sm:$0xff]
    %v296 = vlaneseq
    %v297 = vshrl.u32 %v296, 7
    %v298 = vsub.s32 0, %v297
    %v299 = vrot.slane %v62, %v298
    %v300 = vlaneseq
    %v301 = vshrl.u32 %v300, 7
    %v302 = vsub.s32 1, %v301
    %v303 = vrot.slane %v62, %v302
    %304 = vrot.lane.b32.xlu0 %v299, 113
    %v305 = vpop.permute.xlu0 %304
    %306 = vrot.lane.b32.xlu0 %v303, 113
    %v307 = vpop.permute.xlu0 %306
    %vm308 = vcmask 924672
    %v309 = vsel %vm308, %v305, %v307
    %v313 = vmul.f32 %v289, %v305
    %v314 = vmul.f32 %v290, %v309
    %v315 = vmul.f32 %v291, %v307
    %v316 = vmul.f32 %v292, %v305
    %v317 = vmul.f32 %v293, %v309
    %v318 = vmul.f32 %v294, %v307
    %v319 = vpack.c.bf16 %v316, %v313
    %v320 = vpack.c.bf16 %v317, %v314
    %v321 = vpack.c.bf16 %v318, %v315
    %v325 = vunpack.c.l.b16 %v319
    %v326 = vunpack.c.l.b16 %v320
    %v327 = vunpack.c.l.b16 %v321
    %v328 = vunpack.c.h.b16 %v319
    %v329 = vunpack.c.h.b16 %v320
    %v330 = vunpack.c.h.b16 %v321
    %v331 = vpack.c.b16 %v326, %v325
    %v332 = vpack.c.b16 %v327, %v327
    %v333 = vpack.c.b16 %v329, %v328
    %v334 = vpack.c.b16 %v330, %v330
    %335 = vrot.lane.b32.xlu0 %v331, 15
    %v336 = vpop.permute.xlu0 %335
    %337 = vrot.lane.b32.xlu0 %v332, 15
    %v338 = vpop.permute.xlu0 %337
    %339 = vrot.lane.b32.xlu0 %v333, 15
    %v340 = vpop.permute.xlu0 %339
    %341 = vrot.lane.b32.xlu0 %v334, 15
    %v342 = vpop.permute.xlu0 %341
    %v343 = vrot.slane %v336, 4
    %v344 = vrot.slane %v338, 4
    %v345 = vrot.slane %v340, 4
    %v346 = vrot.slane %v342, 4
    %v347 = vsel %vm146, %v343, %v344
    %vm348 = vcmask 121856
    %v349 = vsel %vm348, %v336, %v347
    %v350 = vsel %vm146, %v345, %v346
    %v351 = vsel %vm348, %v340, %v350
    %354 = vst [vmem:[#allocation3 + $0x40] sm:$0xff] %v349
    %355 = vst [vmem:[#allocation3 + $0x50] sm:$0xff] %v351
    %v356 = vld [vmem:[#allocation2 + $0x20] sm:$0xff]
    %v357 = vld [vmem:[#allocation2 + $0x28] sm:$0xff]
    %v358 = vld [vmem:[#allocation2 + $0x30] sm:$0xff]
    %v359 = vld [vmem:[#allocation2 + $0x60] sm:$0xff]
    %v360 = vld [vmem:[#allocation2 + $0x68] sm:$0xff]
    %v361 = vld [vmem:[#allocation2 + $0x70] sm:$0xff]
    %v362 = vmul.f32 %v356, %v305
    %v363 = vmul.f32 %v357, %v309
    %v364 = vmul.f32 %v358, %v307
    %v365 = vmul.f32 %v359, %v305
    %v366 = vmul.f32 %v360, %v309
    %v367 = vmul.f32 %v361, %v307
    %v368 = vpack.c.bf16 %v365, %v362
    %v369 = vpack.c.bf16 %v366, %v363
    %v370 = vpack.c.bf16 %v367, %v364
    %v374 = vunpack.c.l.b16 %v368
    %v375 = vunpack.c.l.b16 %v369
    %v376 = vunpack.c.l.b16 %v370
    %v377 = vunpack.c.h.b16 %v368
    %v378 = vunpack.c.h.b16 %v369
    %v379 = vunpack.c.h.b16 %v370
    %v380 = vpack.c.b16 %v375, %v374
    %v381 = vpack.c.b16 %v376, %v376
    %v382 = vpack.c.b16 %v378, %v377
    %v383 = vpack.c.b16 %v379, %v379
    %384 = vrot.lane.b32.xlu0 %v380, 15
    %v385 = vpop.permute.xlu0 %384
    %386 = vrot.lane.b32.xlu0 %v381, 15
    %v387 = vpop.permute.xlu0 %386
    %388 = vrot.lane.b32.xlu0 %v382, 15
    %v389 = vpop.permute.xlu0 %388
    %390 = vrot.lane.b32.xlu0 %v383, 15
    %v391 = vpop.permute.xlu0 %390
    %v392 = vrot.slane %v385, 4
    %v393 = vrot.slane %v387, 4
    %v394 = vrot.slane %v389, 4
    %v395 = vrot.slane %v391, 4
    %v396 = vsel %vm146, %v392, %v393
    %v397 = vsel %vm348, %v385, %v396
    %v398 = vsel %vm146, %v394, %v395
    %v399 = vsel %vm348, %v389, %v398
    %402 = vst [vmem:[#allocation3 + $0x48] sm:$0xff] %v397
    %403 = vst [vmem:[#allocation3 + $0x58] sm:$0xff] %v399
    %v404 = vld [vmem:[#allocation2] sm:$0xff]
    %v405 = vld [vmem:[#allocation2 + $0x8] sm:$0xff]
    %v406 = vld [vmem:[#allocation2 + $0x10] sm:$0xff]
    %v407 = vld [vmem:[#allocation2 + $0x40] sm:$0xff]
    %v408 = vld [vmem:[#allocation2 + $0x48] sm:$0xff]
    %v409 = vld [vmem:[#allocation2 + $0x50] sm:$0xff]
    %410 = vrot.lane.b32.xlu0 %v98, 127
    %v411 = vpop.permute.xlu0 %410
    %412 = vrot.lane.b32.xlu0 %v102, 127
    %v413 = vpop.permute.xlu0 %412
    %vm414 = vcmask 1039360
    %v415 = vsel %vm414, %v411, %v413
    %v419 = vmul.f32 %v404, %v411
    %v420 = vmul.f32 %v405, %v415
    %v421 = vmul.f32 %v406, %v413
    %v422 = vmul.f32 %v407, %v411
    %v423 = vmul.f32 %v408, %v415
    %v424 = vmul.f32 %v409, %v413
    %v425 = vpack.c.bf16 %v422, %v419
    %v426 = vpack.c.bf16 %v423, %v420
    %v427 = vpack.c.bf16 %v424, %v421
    %v431 = vunpack.c.l.b16 %v425
    %v432 = vunpack.c.l.b16 %v426
    %v433 = vunpack.c.l.b16 %v427
    %v434 = vunpack.c.h.b16 %v425
    %v435 = vunpack.c.h.b16 %v426
    %v436 = vunpack.c.h.b16 %v427
    %v437 = vpack.c.b16 %v432, %v431
    %v438 = vpack.c.b16 %v433, %v433
    %v439 = vpack.c.b16 %v435, %v434
    %v440 = vpack.c.b16 %v436, %v436
    %441 = vrot.lane.b32.xlu0 %v437, 1
    %v442 = vpop.permute.xlu0 %441
    %443 = vrot.lane.b32.xlu0 %v438, 1
    %v444 = vpop.permute.xlu0 %443
    %445 = vrot.lane.b32.xlu0 %v439, 1
    %v446 = vpop.permute.xlu0 %445
    %447 = vrot.lane.b32.xlu0 %v440, 1
    %v448 = vpop.permute.xlu0 %447
    %v449 = vrot.slane %v442, 4
    %v450 = vrot.slane %v444, 4
    %v451 = vrot.slane %v446, 4
    %v452 = vrot.slane %v448, 4
    %v453 = vsel %vm146, %v449, %v450
    %vm454 = vcmask 7168
    %v455 = vsel %vm454, %v442, %v453
    %v456 = vsel %vm146, %v451, %v452
    %v457 = vsel %vm454, %v446, %v456
    %460 = vst [vmem:[#allocation3 + $0x60] sm:$0xff] %v455
    %461 = vst [vmem:[#allocation3 + $0x70] sm:$0xff] %v457
    %v462 = vld [vmem:[#allocation2 + $0x20] sm:$0xff]
    %v463 = vld [vmem:[#allocation2 + $0x28] sm:$0xff]
    %v464 = vld [vmem:[#allocation2 + $0x30] sm:$0xff]
    %v465 = vld [vmem:[#allocation2 + $0x60] sm:$0xff]
    %v466 = vld [vmem:[#allocation2 + $0x68] sm:$0xff]
    %v467 = vld [vmem:[#allocation2 + $0x70] sm:$0xff]
    %v468 = vmul.f32 %v462, %v411
    %v469 = vmul.f32 %v463, %v415
    %v470 = vmul.f32 %v464, %v413
    %v471 = vmul.f32 %v465, %v411
    %v472 = vmul.f32 %v466, %v415
    %v473 = vmul.f32 %v467, %v413
    %v474 = vpack.c.bf16 %v471, %v468
    %v475 = vpack.c.bf16 %v472, %v469
    %v476 = vpack.c.bf16 %v473, %v470
    %v480 = vunpack.c.l.b16 %v474
    %v481 = vunpack.c.l.b16 %v475
    %v482 = vunpack.c.l.b16 %v476
    %v483 = vunpack.c.h.b16 %v474
    %v484 = vunpack.c.h.b16 %v475
    %v485 = vunpack.c.h.b16 %v476
    %v486 = vpack.c.b16 %v481, %v480
    %v487 = vpack.c.b16 %v482, %v482
    %v488 = vpack.c.b16 %v484, %v483
    %v489 = vpack.c.b16 %v485, %v485
    %490 = vrot.lane.b32.xlu0 %v486, 1
    %v491 = vpop.permute.xlu0 %490
    %492 = vrot.lane.b32.xlu0 %v487, 1
    %v493 = vpop.permute.xlu0 %492
    %494 = vrot.lane.b32.xlu0 %v488, 1
    %v495 = vpop.permute.xlu0 %494
    %496 = vrot.lane.b32.xlu0 %v489, 1
    %v497 = vpop.permute.xlu0 %496
    %v498 = vrot.slane %v491, 4
    %v499 = vrot.slane %v493, 4
    %v500 = vrot.slane %v495, 4
    %v501 = vrot.slane %v497, 4
    %v502 = vsel %vm146, %v498, %v499
    %v503 = vsel %vm454, %v491, %v502
    %v504 = vsel %vm146, %v500, %v501
    %v505 = vsel %vm454, %v495, %v504
    %508 = vst [vmem:[#allocation3 + $0x68] sm:$0xff] %v503
    %509 = vst [vmem:[#allocation3 + $0x78] sm:$0xff] %v505
    %v510 = vld [vmem:[#allocation2 + $0x8] sm:$0xff]
    %v511 = vld [vmem:[#allocation2 + $0x10] sm:$0xff]
    %v512 = vld [vmem:[#allocation2 + $0x48] sm:$0xff]
    %v513 = vld [vmem:[#allocation2 + $0x50] sm:$0xff]
    %v514 = vpack.c.bf16 %v512, %v510
    %v515 = vpack.c.bf16 %v513, %v511
    %v518 = vunpack.c.l.b16 %v514
    %v519 = vunpack.c.l.b16 %v515
    %v520 = vunpack.c.h.b16 %v514
    %v521 = vunpack.c.h.b16 %v515
    %v522 = vpack.c.b16 %v519, %v518
    %v523 = vpack.c.b16 %v521, %v520
    %526 = vst [vmem:[#allocation3 + $0x80] sm:$0xff] %v522
    %527 = vst [vmem:[#allocation3 + $0x90] sm:$0xff] %v523
    %v528 = vld [vmem:[#allocation2 + $0x28] sm:$0xff]
    %v529 = vld [vmem:[#allocation2 + $0x30] sm:$0xff]
    %v530 = vld [vmem:[#allocation2 + $0x68] sm:$0xff]
    %v531 = vld [vmem:[#allocation2 + $0x70] sm:$0xff]
    %v532 = vpack.c.bf16 %v530, %v528
    %v533 = vpack.c.bf16 %v531, %v529
    %v536 = vunpack.c.l.b16 %v532
    %v537 = vunpack.c.l.b16 %v533
    %v538 = vunpack.c.h.b16 %v532
    %v539 = vunpack.c.h.b16 %v533
    %v540 = vpack.c.b16 %v537, %v536
    %v541 = vpack.c.b16 %v539, %v538
    %544 = vst [vmem:[#allocation3 + $0x88] sm:$0xff] %v540
    %545 = vst [vmem:[#allocation3 + $0x98] sm:$0xff] %v541
    %v546 = vld [vmem:[#allocation2 + $0x8] sm:$0xff]
    %v547 = vld [vmem:[#allocation2 + $0x10] sm:$0xff]
    %v548 = vld [vmem:[#allocation2 + $0x18] sm:$0xff]
    %v549 = vld [vmem:[#allocation2 + $0x48] sm:$0xff]
    %v550 = vld [vmem:[#allocation2 + $0x50] sm:$0xff]
    %v551 = vld [vmem:[#allocation2 + $0x58] sm:$0xff]
    %552 = vrot.lane.b32.xlu0 %v299, 1
    %v553 = vpop.permute.xlu0 %552
    %554 = vrot.lane.b32.xlu0 %v303, 1
    %v555 = vpop.permute.xlu0 %554
    %vm556 = vcmask 7168
    %v557 = vsel %vm556, %v553, %v555
    %v561 = vmul.f32 %v546, %v553
    %v562 = vmul.f32 %v547, %v557
    %v563 = vmul.f32 %v548, %v555
    %v564 = vmul.f32 %v549, %v553
    %v565 = vmul.f32 %v550, %v557
    %v566 = vmul.f32 %v551, %v555
    %v567 = vpack.c.bf16 %v564, %v561
    %v568 = vpack.c.bf16 %v565, %v562
    %v569 = vpack.c.bf16 %v566, %v563
    %v573 = vunpack.c.l.b16 %v567
    %v574 = vunpack.c.l.b16 %v568
    %v575 = vunpack.c.l.b16 %v569
    %v576 = vunpack.c.h.b16 %v567
    %v577 = vunpack.c.h.b16 %v568
    %v578 = vunpack.c.h.b16 %v569
    %v579 = vpack.c.b16 %v574, %v573
    %v580 = vpack.c.b16 %v575, %v575
    %v581 = vpack.c.b16 %v577, %v576
    %v582 = vpack.c.b16 %v578, %v578
    %583 = vrot.lane.b32.xlu0 %v579, 127
    %v584 = vpop.permute.xlu0 %583
    %585 = vrot.lane.b32.xlu0 %v580, 127
    %v586 = vpop.permute.xlu0 %585
    %587 = vrot.lane.b32.xlu0 %v581, 127
    %v588 = vpop.permute.xlu0 %587
    %589 = vrot.lane.b32.xlu0 %v582, 127
    %v590 = vpop.permute.xlu0 %589
    %v591 = vrot.slane %v584, 4
    %v592 = vrot.slane %v586, 4
    %v593 = vrot.slane %v588, 4
    %v594 = vrot.slane %v590, 4
    %v595 = vsel %vm146, %v591, %v592
    %vm596 = vcmask 1039360
    %v597 = vsel %vm596, %v584, %v595
    %v598 = vsel %vm146, %v593, %v594
    %v599 = vsel %vm596, %v588, %v598
    %602 = vst [vmem:[#allocation3 + $0xa0] sm:$0xff] %v597
    %603 = vst [vmem:[#allocation3 + $0xb0] sm:$0xff] %v599
    %v604 = vld [vmem:[#allocation2 + $0x28] sm:$0xff]
    %v605 = vld [vmem:[#allocation2 + $0x30] sm:$0xff]
    %v606 = vld [vmem:[#allocation2 + $0x38] sm:$0xff]
    %v607 = vld [vmem:[#allocation2 + $0x68] sm:$0xff]
    %v608 = vld [vmem:[#allocation2 + $0x70] sm:$0xff]
    %v609 = vld [vmem:[#allocation2 + $0x78] sm:$0xff]
    %v610 = vmul.f32 %v604, %v553
    %v611 = vmul.f32 %v605, %v557
    %v612 = vmul.f32 %v606, %v555
    %v613 = vmul.f32 %v607, %v553
    %v614 = vmul.f32 %v608, %v557
    %v615 = vmul.f32 %v609, %v555
    %v616 = vpack.c.bf16 %v613, %v610
    %v617 = vpack.c.bf16 %v614, %v611
    %v618 = vpack.c.bf16 %v615, %v612
    %v622 = vunpack.c.l.b16 %v616
    %v623 = vunpack.c.l.b16 %v617
    %v624 = vunpack.c.l.b16 %v618
    %v625 = vunpack.c.h.b16 %v616
    %v626 = vunpack.c.h.b16 %v617
    %v627 = vunpack.c.h.b16 %v618
    %v628 = vpack.c.b16 %v623, %v622
    %v629 = vpack.c.b16 %v624, %v624
    %v630 = vpack.c.b16 %v626, %v625
    %v631 = vpack.c.b16 %v627, %v627
    %632 = vrot.lane.b32.xlu0 %v628, 127
    %v633 = vpop.permute.xlu0 %632
    %634 = vrot.lane.b32.xlu0 %v629, 127
    %v635 = vpop.permute.xlu0 %634
    %636 = vrot.lane.b32.xlu0 %v630, 127
    %v637 = vpop.permute.xlu0 %636
    %638 = vrot.lane.b32.xlu0 %v631, 127
    %v639 = vpop.permute.xlu0 %638
    %v640 = vrot.slane %v633, 4
    %v641 = vrot.slane %v635, 4
    %v642 = vrot.slane %v637, 4
    %v643 = vrot.slane %v639, 4
    %v644 = vsel %vm146, %v640, %v641
    %v645 = vsel %vm596, %v633, %v644
    %v646 = vsel %vm146, %v642, %v643
    %v647 = vsel %vm596, %v637, %v646
    %650 = vst [vmem:[#allocation3 + $0xa8] sm:$0xff] %v645
    %651 = vst [vmem:[#allocation3 + $0xb8] sm:$0xff] %v647
    %v652 = vld [vmem:[#allocation2 + $0x8] sm:$0xff]
    %v653 = vld [vmem:[#allocation2 + $0x10] sm:$0xff]
    %v654 = vld [vmem:[#allocation2 + $0x18] sm:$0xff]
    %v655 = vld [vmem:[#allocation2 + $0x48] sm:$0xff]
    %v656 = vld [vmem:[#allocation2 + $0x50] sm:$0xff]
    %v657 = vld [vmem:[#allocation2 + $0x58] sm:$0xff]
    %658 = vrot.lane.b32.xlu0 %v98, 15
    %v659 = vpop.permute.xlu0 %658
    %660 = vrot.lane.b32.xlu0 %v102, 15
    %v661 = vpop.permute.xlu0 %660
    %vm662 = vcmask 121856
    %v663 = vsel %vm662, %v659, %v661
    %v667 = vmul.f32 %v652, %v659
    %v668 = vmul.f32 %v653, %v663
    %v669 = vmul.f32 %v654, %v661
    %v670 = vmul.f32 %v655, %v659
    %v671 = vmul.f32 %v656, %v663
    %v672 = vmul.f32 %v657, %v661
    %v673 = vpack.c.bf16 %v670, %v667
    %v674 = vpack.c.bf16 %v671, %v668
    %v675 = vpack.c.bf16 %v672, %v669
    %v679 = vunpack.c.l.b16 %v673
    %v680 = vunpack.c.l.b16 %v674
    %v681 = vunpack.c.l.b16 %v675
    %v682 = vunpack.c.h.b16 %v673
    %v683 = vunpack.c.h.b16 %v674
    %v684 = vunpack.c.h.b16 %v675
    %v685 = vpack.c.b16 %v680, %v679
    %v686 = vpack.c.b16 %v681, %v681
    %v687 = vpack.c.b16 %v683, %v682
    %v688 = vpack.c.b16 %v684, %v684
    %689 = vrot.lane.b32.xlu0 %v685, 113
    %v690 = vpop.permute.xlu0 %689
    %691 = vrot.lane.b32.xlu0 %v686, 113
    %v692 = vpop.permute.xlu0 %691
    %693 = vrot.lane.b32.xlu0 %v687, 113
    %v694 = vpop.permute.xlu0 %693
    %695 = vrot.lane.b32.xlu0 %v688, 113
    %v696 = vpop.permute.xlu0 %695
    %v697 = vrot.slane %v690, 4
    %v698 = vrot.slane %v692, 4
    %v699 = vrot.slane %v694, 4
    %v700 = vrot.slane %v696, 4
    %v701 = vsel %vm146, %v697, %v698
    %vm702 = vcmask 924672
    %v703 = vsel %vm702, %v690, %v701
    %v704 = vsel %vm146, %v699, %v700
    %v705 = vsel %vm702, %v694, %v704
    %708 = vst [vmem:[#allocation3 + $0xc0] sm:$0xff] %v703
    %709 = vst [vmem:[#allocation3 + $0xd0] sm:$0xff] %v705
    %v710 = vld [vmem:[#allocation2 + $0x28] sm:$0xff]
    %v711 = vld [vmem:[#allocation2 + $0x30] sm:$0xff]
    %v712 = vld [vmem:[#allocation2 + $0x38] sm:$0xff]
    %v713 = vld [vmem:[#allocation2 + $0x68] sm:$0xff]
    %v714 = vld [vmem:[#allocation2 + $0x70] sm:$0xff]
    %v715 = vld [vmem:[#allocation2 + $0x78] sm:$0xff]
    %v716 = vmul.f32 %v710, %v659
    %v717 = vmul.f32 %v711, %v663
    %v718 = vmul.f32 %v712, %v661
    %v719 = vmul.f32 %v713, %v659
    %v720 = vmul.f32 %v714, %v663
    %v721 = vmul.f32 %v715, %v661
    %v722 = vpack.c.bf16 %v719, %v716
    %v723 = vpack.c.bf16 %v720, %v717
    %v724 = vpack.c.bf16 %v721, %v718
    %v728 = vunpack.c.l.b16 %v722
    %v729 = vunpack.c.l.b16 %v723
    %v730 = vunpack.c.l.b16 %v724
    %v731 = vunpack.c.h.b16 %v722
    %v732 = vunpack.c.h.b16 %v723
    %v733 = vunpack.c.h.b16 %v724
    %v734 = vpack.c.b16 %v729, %v728
    %v735 = vpack.c.b16 %v730, %v730
    %v736 = vpack.c.b16 %v732, %v731
    %v737 = vpack.c.b16 %v733, %v733
    %738 = vrot.lane.b32.xlu0 %v734, 113
    %v739 = vpop.permute.xlu0 %738
    %740 = vrot.lane.b32.xlu0 %v735, 113
    %v741 = vpop.permute.xlu0 %740
    %742 = vrot.lane.b32.xlu0 %v736, 113
    %v743 = vpop.permute.xlu0 %742
    %744 = vrot.lane.b32.xlu0 %v737, 113
    %v745 = vpop.permute.xlu0 %744
    %v746 = vrot.slane %v739, 4
    %v747 = vrot.slane %v741, 4
    %v748 = vrot.slane %v743, 4
    %v749 = vrot.slane %v745, 4
    %v750 = vsel %vm146, %v746, %v747
    %v751 = vsel %vm702, %v739, %v750
    %v752 = vsel %vm146, %v748, %v749
    %v753 = vsel %vm702, %v743, %v752
    %756 = vst [vmem:[#allocation3 + $0xc8] sm:$0xff] %v751
    %757 = vst [vmem:[#allocation3 + $0xd8] sm:$0xff] %v753
    %v758 = vld [vmem:[#allocation2 + $0x8] sm:$0xff]
    %v759 = vld [vmem:[#allocation2 + $0x10] sm:$0xff]
    %v760 = vld [vmem:[#allocation2 + $0x18] sm:$0xff]
    %v761 = vld [vmem:[#allocation2 + $0x48] sm:$0xff]
    %v762 = vld [vmem:[#allocation2 + $0x50] sm:$0xff]
    %v763 = vld [vmem:[#allocation2 + $0x58] sm:$0xff]
    %v764 = vpack.c.bf16 %v761, %v758
    %v765 = vpack.c.bf16 %v762, %v759
    %v766 = vpack.c.bf16 %v763, %v760
    %v770 = vunpack.c.l.b16 %v764
    %v771 = vunpack.c.l.b16 %v765
    %v772 = vunpack.c.l.b16 %v766
    %v773 = vunpack.c.h.b16 %v764
    %v774 = vunpack.c.h.b16 %v765
    %v775 = vunpack.c.h.b16 %v766
    %v776 = vpack.c.b16 %v771, %v770
    %v777 = vpack.c.b16 %v772, %v772
    %v778 = vpack.c.b16 %v774, %v773
    %v779 = vpack.c.b16 %v775, %v775
    %780 = vrot.lane.b32.xlu0 %v776, 112
    %v781 = vpop.permute.xlu0 %780
    %782 = vrot.lane.b32.xlu0 %v777, 112
    %v783 = vpop.permute.xlu0 %782
    %784 = vrot.lane.b32.xlu0 %v778, 112
    %v785 = vpop.permute.xlu0 %784
    %786 = vrot.lane.b32.xlu0 %v779, 112
    %v787 = vpop.permute.xlu0 %786
    %v788 = vrot.slane %v781, 4
    %v789 = vrot.slane %v783, 4
    %v790 = vrot.slane %v785, 4
    %v791 = vrot.slane %v787, 4
    %v792 = vsel %vm146, %v788, %v789
    %vm793 = vcmask 916480
    %v794 = vsel %vm793, %v781, %v792
    %v795 = vsel %vm146, %v790, %v791
    %v796 = vsel %vm793, %v785, %v795
    %799 = vst [vmem:[#allocation3 + $0xe0] sm:$0xff] %v794
    %800 = vst [vmem:[#allocation3 + $0xf0] sm:$0xff] %v796
    %v801 = vld [vmem:[#allocation2 + $0x28] sm:$0xff]
    %v802 = vld [vmem:[#allocation2 + $0x30] sm:$0xff]
    %v803 = vld [vmem:[#allocation2 + $0x38] sm:$0xff]
    %v804 = vld [vmem:[#allocation2 + $0x68] sm:$0xff]
    %v805 = vld [vmem:[#allocation2 + $0x70] sm:$0xff]
    %v806 = vld [vmem:[#allocation2 + $0x78] sm:$0xff]
    %v807 = vpack.c.bf16 %v804, %v801
    %v808 = vpack.c.bf16 %v805, %v802
    %v809 = vpack.c.bf16 %v806, %v803
    %v813 = vunpack.c.l.b16 %v807
    %v814 = vunpack.c.l.b16 %v808
    %v815 = vunpack.c.l.b16 %v809
    %v816 = vunpack.c.h.b16 %v807
    %v817 = vunpack.c.h.b16 %v808
    %v818 = vunpack.c.h.b16 %v809
    %v819 = vpack.c.b16 %v814, %v813
    %v820 = vpack.c.b16 %v815, %v815
    %v821 = vpack.c.b16 %v817, %v816
    %v822 = vpack.c.b16 %v818, %v818
    %823 = vrot.lane.b32.xlu0 %v819, 112
    %v824 = vpop.permute.xlu0 %823
    %825 = vrot.lane.b32.xlu0 %v820, 112
    %v826 = vpop.permute.xlu0 %825
    %827 = vrot.lane.b32.xlu0 %v821, 112
    %v828 = vpop.permute.xlu0 %827
    %829 = vrot.lane.b32.xlu0 %v822, 112
    %v830 = vpop.permute.xlu0 %829
    %v831 = vrot.slane %v824, 4
    %v832 = vrot.slane %v826, 4
    %v833 = vrot.slane %v828, 4
    %v834 = vrot.slane %v830, 4
    %v835 = vsel %vm146, %v831, %v832
    %v836 = vsel %vm793, %v824, %v835
    %v837 = vsel %vm146, %v833, %v834
    %v838 = vsel %vm793, %v828, %v837
    %841 = vst [vmem:[#allocation3 + $0xe8] sm:$0xff] %v836
    %842 = vst [vmem:[#allocation3 + $0xf8] sm:$0xff] %v838
    %v843 = vld [vmem:[#allocation2 + $0x8] sm:$0xff]
    %v844 = vld [vmem:[#allocation2 + $0x10] sm:$0xff]
    %v845 = vld [vmem:[#allocation2 + $0x18] sm:$0xff]
    %v846 = vld [vmem:[#allocation2 + $0x48] sm:$0xff]
    %v847 = vld [vmem:[#allocation2 + $0x50] sm:$0xff]
    %v848 = vld [vmem:[#allocation2 + $0x58] sm:$0xff]
    %849 = vrot.lane.b32.xlu0 %v299, 17
    %v850 = vpop.permute.xlu0 %849
    %851 = vrot.lane.b32.xlu0 %v303, 17
    %v852 = vpop.permute.xlu0 %851
    %vm853 = vcmask 138240
    %v854 = vsel %vm853, %v850, %v852
    %v858 = vmul.f32 %v843, %v850
    %v859 = vmul.f32 %v844, %v854
    %v860 = vmul.f32 %v845, %v852
    %v861 = vmul.f32 %v846, %v850
    %v862 = vmul.f32 %v847, %v854
    %v863 = vmul.f32 %v848, %v852
    %v864 = vpack.c.bf16 %v861, %v858
    %v865 = vpack.c.bf16 %v862, %v859
    %v866 = vpack.c.bf16 %v863, %v860
    %v870 = vunpack.c.l.b16 %v864
    %v871 = vunpack.c.l.b16 %v865
    %v872 = vunpack.c.l.b16 %v866
    %v873 = vunpack.c.h.b16 %v864
    %v874 = vunpack.c.h.b16 %v865
    %v875 = vunpack.c.h.b16 %v866
    %v876 = vpack.c.b16 %v871, %v870
    %v877 = vpack.c.b16 %v872, %v872
    %v878 = vpack.c.b16 %v874, %v873
    %v879 = vpack.c.b16 %v875, %v875
    %880 = vrot.lane.b32.xlu0 %v876, 111
    %v881 = vpop.permute.xlu0 %880
    %882 = vrot.lane.b32.xlu0 %v877, 111
    %v883 = vpop.permute.xlu0 %882
    %884 = vrot.lane.b32.xlu0 %v878, 111
    %v885 = vpop.permute.xlu0 %884
    %886 = vrot.lane.b32.xlu0 %v879, 111
    %v887 = vpop.permute.xlu0 %886
    %v888 = vrot.slane %v881, 4
    %v889 = vrot.slane %v883, 4
    %v890 = vrot.slane %v885, 4
    %v891 = vrot.slane %v887, 4
    %v892 = vsel %vm146, %v888, %v889
    %vm893 = vcmask 908288
    %v894 = vsel %vm893, %v881, %v892
    %v895 = vsel %vm146, %v890, %v891
    %v896 = vsel %vm893, %v885, %v895
    %899 = vst [vmem:[#allocation3 + $0x100] sm:$0xff] %v894
    %900 = vst [vmem:[#allocation3 + $0x110] sm:$0xff] %v896
    %v901 = vld [vmem:[#allocation2 + $0x28] sm:$0xff]
    %v902 = vld [vmem:[#allocation2 + $0x30] sm:$0xff]
    %v903 = vld [vmem:[#allocation2 + $0x38] sm:$0xff]
    %v904 = vld [vmem:[#allocation2 + $0x68] sm:$0xff]
    %v905 = vld [vmem:[#allocation2 + $0x70] sm:$0xff]
    %v906 = vld [vmem:[#allocation2 + $0x78] sm:$0xff]
    %v907 = vmul.f32 %v901, %v850
    %v908 = vmul.f32 %v902, %v854
    %v909 = vmul.f32 %v903, %v852
    %v910 = vmul.f32 %v904, %v850
    %v911 = vmul.f32 %v905, %v854
    %v912 = vmul.f32 %v906, %v852
    %v913 = vpack.c.bf16 %v910, %v907
    %v914 = vpack.c.bf16 %v911, %v908
    %v915 = vpack.c.bf16 %v912, %v909
    %v919 = vunpack.c.l.b16 %v913
    %v920 = vunpack.c.l.b16 %v914
    %v921 = vunpack.c.l.b16 %v915
    %v922 = vunpack.c.h.b16 %v913
    %v923 = vunpack.c.h.b16 %v914
    %v924 = vunpack.c.h.b16 %v915
    %v925 = vpack.c.b16 %v920, %v919
    %v926 = vpack.c.b16 %v921, %v921
    %v927 = vpack.c.b16 %v923, %v922
    %v928 = vpack.c.b16 %v924, %v924
    %929 = vrot.lane.b32.xlu0 %v925, 111
    %v930 = vpop.permute.xlu0 %929
    %931 = vrot.lane.b32.xlu0 %v926, 111
    %v932 = vpop.permute.xlu0 %931
    %933 = vrot.lane.b32.xlu0 %v927, 111
    %v934 = vpop.permute.xlu0 %933
    %935 = vrot.lane.b32.xlu0 %v928, 111
    %v936 = vpop.permute.xlu0 %935
    %v937 = vrot.slane %v930, 4
    %v938 = vrot.slane %v932, 4
    %v939 = vrot.slane %v934, 4
    %v940 = vrot.slane %v936, 4
    %v941 = vsel %vm146, %v937, %v938
    %v942 = vsel %vm893, %v930, %v941
    %v943 = vsel %vm146, %v939, %v940
    %v944 = vsel %vm893, %v934, %v943
    %947 = vst [vmem:[#allocation3 + $0x108] sm:$0xff] %v942
    %948 = vst [vmem:[#allocation3 + $0x118] sm:$0xff] %v944
    %v949 = vld [vmem:[#allocation7] sm:$0xff]
    %v950 = vld [vmem:[#allocation7 + $0x8] sm:$0xff]
    %v951 = vld [vmem:[#allocation7 + $0x10] sm:$0xff]
    %v952 = vld [vmem:[#allocation7 + $0x18] sm:$0xff]
    %v953 = vld [vmem:[#allocation3] sm:$0xff]
    %v954 = vld [vmem:[#allocation3 + $0x8] sm:$0xff]
    %v955 = vld [vmem:[#allocation3 + $0x10] sm:$0xff]
    %v956 = vld [vmem:[#allocation3 + $0x18] sm:$0xff]
    %v957 = vld [vmem:[#allocation3 + $0x20] sm:$0xff]
    %v958 = vld [vmem:[#allocation3 + $0x28] sm:$0xff]
    %v959 = vld [vmem:[#allocation3 + $0x30] sm:$0xff]
    %v960 = vld [vmem:[#allocation3 + $0x38] sm:$0xff]
    %v961 = vld [vmem:[#allocation3 + $0x40] sm:$0xff]
    %v962 = vld [vmem:[#allocation3 + $0x48] sm:$0xff]
    %v963 = vld [vmem:[#allocation3 + $0x50] sm:$0xff]
    %v964 = vld [vmem:[#allocation3 + $0x58] sm:$0xff]
    %v965 = vld [vmem:[#allocation3 + $0x60] sm:$0xff]
    %v966 = vld [vmem:[#allocation3 + $0x68] sm:$0xff]
    %v967 = vld [vmem:[#allocation3 + $0x70] sm:$0xff]
    %v968 = vld [vmem:[#allocation3 + $0x78] sm:$0xff]
    %v969 = vld [vmem:[#allocation3 + $0x80] sm:$0xff]
    %v970 = vld [vmem:[#allocation3 + $0x88] sm:$0xff]
    %v971 = vld [vmem:[#allocation3 + $0x90] sm:$0xff]
    %v972 = vld [vmem:[#allocation3 + $0x98] sm:$0xff]
    %v973 = vld [vmem:[#allocation3 + $0xa0] sm:$0xff]
    %v974 = vld [vmem:[#allocation3 + $0xa8] sm:$0xff]
    %v975 = vld [vmem:[#allocation3 + $0xb0] sm:$0xff]
    %v976 = vld [vmem:[#allocation3 + $0xb8] sm:$0xff]
    %v977 = vld [vmem:[#allocation3 + $0xc0] sm:$0xff]
    %v978 = vld [vmem:[#allocation3 + $0xc8] sm:$0xff]
    %v979 = vld [vmem:[#allocation3 + $0xd0] sm:$0xff]
    %v980 = vld [vmem:[#allocation3 + $0xd8] sm:$0xff]
    %v981 = vld [vmem:[#allocation3 + $0xe0] sm:$0xff]
    %v982 = vld [vmem:[#allocation3 + $0xe8] sm:$0xff]
    %v983 = vld [vmem:[#allocation3 + $0xf0] sm:$0xff]
    %v984 = vld [vmem:[#allocation3 + $0xf8] sm:$0xff]
    %v985 = vld [vmem:[#allocation3 + $0x100] sm:$0xff]
    %v986 = vld [vmem:[#allocation3 + $0x108] sm:$0xff]
    %v987 = vld [vmem:[#allocation3 + $0x110] sm:$0xff]
    %v988 = vld [vmem:[#allocation3 + $0x118] sm:$0xff]
    %v993 = vunpack.c.l.b16 %v949
    %v994 = vunpack.c.h.b16 %v949
    %v995 = vunpack.c.l.b16 %v950
    %v996 = vunpack.c.h.b16 %v950
    %v997 = vunpack.c.l.b16 %v951
    %v998 = vunpack.c.h.b16 %v951
    %v999 = vunpack.c.l.b16 %v952
    %v1000 = vunpack.c.h.b16 %v952
    %v1001 = vpack.c.b16 %v995, %v993
    %v1002 = vpack.c.b16 %v996, %v994
    %v1003 = vpack.c.b16 %v999, %v997
    %v1004 = vpack.c.b16 %v1000, %v998
    %v1043 = vunpack.c.l.b16 %v953
    %v1044 = vunpack.c.h.b16 %v953
    %v1045 = vunpack.c.l.b16 %v954
    %v1046 = vunpack.c.h.b16 %v954
    %v1047 = vunpack.c.l.b16 %v955
    %v1048 = vunpack.c.h.b16 %v955
    %v1049 = vunpack.c.l.b16 %v956
    %v1050 = vunpack.c.h.b16 %v956
    %v1051 = vunpack.c.l.b16 %v957
    %v1052 = vunpack.c.h.b16 %v957
    %v1053 = vunpack.c.l.b16 %v958
    %v1054 = vunpack.c.h.b16 %v958
    %v1055 = vunpack.c.l.b16 %v959
    %v1056 = vunpack.c.h.b16 %v959
    %v1057 = vunpack.c.l.b16 %v960
    %v1058 = vunpack.c.h.b16 %v960
    %v1059 = vunpack.c.l.b16 %v961
    %v1060 = vunpack.c.h.b16 %v961
    %v1061 = vunpack.c.l.b16 %v962
    %v1062 = vunpack.c.h.b16 %v962
    %v1063 = vunpack.c.l.b16 %v963
    %v1064 = vunpack.c.h.b16 %v963
    %v1065 = vunpack.c.l.b16 %v964
    %v1066 = vunpack.c.h.b16 %v964
    %v1067 = vunpack.c.l.b16 %v965
    %v1068 = vunpack.c.h.b16 %v965
    %v1069 = vunpack.c.l.b16 %v966
    %v1070 = vunpack.c.h.b16 %v966
    %v1071 = vunpack.c.l.b16 %v967
    %v1072 = vunpack.c.h.b16 %v967
    %v1073 = vunpack.c.l.b16 %v968
    %v1074 = vunpack.c.h.b16 %v968
    %v1075 = vunpack.c.l.b16 %v969
    %v1076 = vunpack.c.h.b16 %v969
    %v1077 = vunpack.c.l.b16 %v970
    %v1078 = vunpack.c.h.b16 %v970
    %v1079 = vunpack.c.l.b16 %v971
    %v1080 = vunpack.c.h.b16 %v971
    %v1081 = vunpack.c.l.b16 %v972
    %v1082 = vunpack.c.h.b16 %v972
    %v1083 = vunpack.c.l.b16 %v973
    %v1084 = vunpack.c.h.b16 %v973
    %v1085 = vunpack.c.l.b16 %v974
    %v1086 = vunpack.c.h.b16 %v974
    %v1087 = vunpack.c.l.b16 %v975
    %v1088 = vunpack.c.h.b16 %v975
    %v1089 = vunpack.c.l.b16 %v976
    %v1090 = vunpack.c.h.b16 %v976
    %v1091 = vunpack.c.l.b16 %v977
    %v1092 = vunpack.c.h.b16 %v977
    %v1093 = vunpack.c.l.b16 %v978
    %v1094 = vunpack.c.h.b16 %v978
    %v1095 = vunpack.c.l.b16 %v979
    %v1096 = vunpack.c.h.b16 %v979
    %v1097 = vunpack.c.l.b16 %v980
    %v1098 = vunpack.c.h.b16 %v980
    %v1099 = vunpack.c.l.b16 %v981
    %v1100 = vunpack.c.h.b16 %v981
    %v1101 = vunpack.c.l.b16 %v982
    %v1102 = vunpack.c.h.b16 %v982
    %v1103 = vunpack.c.l.b16 %v983
    %v1104 = vunpack.c.h.b16 %v983
    %v1105 = vunpack.c.l.b16 %v984
    %v1106 = vunpack.c.h.b16 %v984
    %v1107 = vunpack.c.l.b16 %v985
    %v1108 = vunpack.c.h.b16 %v985
    %v1109 = vunpack.c.l.b16 %v986
    %v1110 = vunpack.c.h.b16 %v986
    %v1111 = vunpack.c.l.b16 %v987
    %v1112 = vunpack.c.h.b16 %v987
    %v1113 = vunpack.c.l.b16 %v988
    %v1114 = vunpack.c.h.b16 %v988
    %v1115 = vpack.c.b16 %v1047, %v1043
    %v1116 = vpack.c.b16 %v1048, %v1044
    %v1117 = vpack.c.b16 %v1049, %v1045
    %v1118 = vpack.c.b16 %v1050, %v1046
    %v1119 = vpack.c.b16 %v1055, %v1051
    %v1120 = vpack.c.b16 %v1056, %v1052
    %v1121 = vpack.c.b16 %v1057, %v1053
    %v1122 = vpack.c.b16 %v1058, %v1054
    %v1123 = vpack.c.b16 %v1063, %v1059
    %v1124 = vpack.c.b16 %v1064, %v1060
    %v1125 = vpack.c.b16 %v1065, %v1061
    %v1126 = vpack.c.b16 %v1066, %v1062
    %v1127 = vpack.c.b16 %v1071, %v1067
    %v1128 = vpack.c.b16 %v1072, %v1068
    %v1129 = vpack.c.b16 %v1073, %v1069
    %v1130 = vpack.c.b16 %v1074, %v1070
    %v1131 = vpack.c.b16 %v1079, %v1075
    %v1132 = vpack.c.b16 %v1080, %v1076
    %v1133 = vpack.c.b16 %v1081, %v1077
    %v1134 = vpack.c.b16 %v1082, %v1078
    %v1135 = vpack.c.b16 %v1087, %v1083
    %v1136 = vpack.c.b16 %v1088, %v1084
    %v1137 = vpack.c.b16 %v1089, %v1085
    %v1138 = vpack.c.b16 %v1090, %v1086
    %v1139 = vpack.c.b16 %v1095, %v1091
    %v1140 = vpack.c.b16 %v1096, %v1092
    %v1141 = vpack.c.b16 %v1097, %v1093
    %v1142 = vpack.c.b16 %v1098, %v1094
    %v1143 = vpack.c.b16 %v1103, %v1099
    %v1144 = vpack.c.b16 %v1104, %v1100
    %v1145 = vpack.c.b16 %v1105, %v1101
    %v1146 = vpack.c.b16 %v1106, %v1102
    %v1147 = vpack.c.b16 %v1111, %v1107
    %v1148 = vpack.c.b16 %v1112, %v1108
    %v1149 = vpack.c.b16 %v1113, %v1109
    %v1150 = vpack.c.b16 %v1114, %v1110
    %vm1187 = vcmask 130048
    %v1189 = vsel %vm1187, %v1002, 0
    %v1192 = vsel %vm1187, %v1004, 0
    %1194 = vmatprep.subr.bf16.mxu0 %v1144
    %1195 = vmatpush1.bf16.msra.mxu0 %v1143
    %1196 = vmatprep.subr.bf16.mxu0 %v1140
    %1197 = vmatpush1.bf16.msra.mxu0 %v1139
    %1198 = vmatprep.subr.bf16.mxu0 %v1136
    %1199 = vmatpush1.bf16.msra.mxu0 %v1135
    %1200 = vmatprep.subr.bf16.mxu0 %v1132
    %1201 = vmatpush1.bf16.msra.mxu0 %v1131
    %1202 = vmatprep.subr.bf16.mxu0 %v1128
    %1203 = vmatpush1.bf16.msra.mxu0 %v1127
    %1204 = vmatprep.subr.bf16.mxu0 %v1124
    %1205 = vmatpush1.bf16.msra.mxu0 %v1123
    %1206 = vmatprep.subr.bf16.mxu0 %v1120
    %1207 = vmatpush1.bf16.msra.mxu0 %v1119
    %1208 = vmatprep.subr.bf16.mxu0 %v1116
    %1209 = vmatpush1.bf16.msra.mxu0 %v1115
    %1210 = vmatprep.subr.bf16.mxu0 0
    %1211 = vmatpush2.bf16.msra.mxu0 0
    %1212 = vmatprep.subr.bf16.mxu0 0
    %1213 = vmatpush2.bf16.msra.mxu0 0
    %1214 = vmatprep.subr.bf16.mxu0 0
    %1215 = vmatpush2.bf16.msra.mxu0 0
    %1216 = vmatprep.subr.bf16.mxu0 0
    %1217 = vmatpush2.bf16.msra.mxu0 0
    %1218 = vmatprep.subr.bf16.mxu0 0
    %1219 = vmatpush2.bf16.msra.mxu0 0
    %1220 = vmatprep.subr.bf16.mxu0 0
    %1221 = vmatpush2.bf16.msra.mxu0 0
    %1222 = vmatprep.subr.bf16.mxu0 0
    %1223 = vmatpush2.bf16.msra.mxu0 0
    %1224 = vmatprep.subr.bf16.mxu0 %v1148
    %1225 = vmatpush2.bf16.msra.mxu0 %v1147
    %1226 = vmatprep.mubr.bf16.mxu0 %v1189
    %1227 = vmatmul.mubr.bf16.gmra.mxu0 %v1001
    %v1228 = vpop.f32.mrf.mxu0
    %v1229 = vadd.f32 0.0, %v1228
    %v1230 = vpop.f32.mrf.mxu0
    %v1231 = vadd.f32 0.0, %v1230
    %v1232 = vpop.f32.mrf.mxu0
    %v1233 = vadd.f32 0.0, %v1232
    %v1234 = vpop.f32.mrf.mxu0
    %v1235 = vadd.f32 0.0, %v1234
    %1236 = vmatprep.mubr.bf16.mxu0 %v1192
    %1237 = vmatmul.mubr.bf16.gmra.mxu0 %v1003
    %v1238 = vpop.f32.mrf.mxu0
    %v1239 = vadd.f32 0.0, %v1238
    %v1240 = vpop.f32.mrf.mxu0
    %v1241 = vadd.f32 0.0, %v1240
    %v1242 = vpop.f32.mrf.mxu0
    %v1243 = vpop.f32.mrf.mxu0
    %1244 = vdwg.mxu0
    %1245 = vmatprep.subr.bf16.mxu0 %v1146
    %1246 = vmatpush1.bf16.msra.mxu0 %v1145
    %1247 = vmatprep.subr.bf16.mxu0 %v1142
    %1248 = vmatpush1.bf16.msra.mxu0 %v1141
    %1249 = vmatprep.subr.bf16.mxu0 %v1138
    %1250 = vmatpush1.bf16.msra.mxu0 %v1137
    %1251 = vmatprep.subr.bf16.mxu0 %v1134
    %1252 = vmatpush1.bf16.msra.mxu0 %v1133
    %1253 = vmatprep.subr.bf16.mxu0 %v1130
    %1254 = vmatpush1.bf16.msra.mxu0 %v1129
    %1255 = vmatprep.subr.bf16.mxu0 %v1126
    %1256 = vmatpush1.bf16.msra.mxu0 %v1125
    %1257 = vmatprep.subr.bf16.mxu0 %v1122
    %1258 = vmatpush1.bf16.msra.mxu0 %v1121
    %1259 = vmatprep.subr.bf16.mxu0 %v1118
    %1260 = vmatpush1.bf16.msra.mxu0 %v1117
    %1261 = vmatprep.subr.bf16.mxu0 0
    %1262 = vmatpush2.bf16.msra.mxu0 0
    %1263 = vmatprep.subr.bf16.mxu0 0
    %1264 = vmatpush2.bf16.msra.mxu0 0
    %1265 = vmatprep.subr.bf16.mxu0 0
    %1266 = vmatpush2.bf16.msra.mxu0 0
    %1267 = vmatprep.subr.bf16.mxu0 0
    %1268 = vmatpush2.bf16.msra.mxu0 0
    %1269 = vmatprep.subr.bf16.mxu0 0
    %1270 = vmatpush2.bf16.msra.mxu0 0
    %1271 = vmatprep.subr.bf16.mxu0 0
    %1272 = vmatpush2.bf16.msra.mxu0 0
    %1273 = vmatprep.subr.bf16.mxu0 0
    %1274 = vmatpush2.bf16.msra.mxu0 0
    %1275 = vmatprep.subr.bf16.mxu0 %v1150
    %1276 = vmatpush2.bf16.msra.mxu0 %v1149
    %1277 = vmatprep.mubr.bf16.mxu0 %v1189
    %1278 = vmatmul.mubr.bf16.gmra.mxu0 %v1001
    %v1279 = vpop.f32.mrf.mxu0
    %v1280 = vadd.f32 0.0, %v1279
    %v1281 = vpop.f32.mrf.mxu0
    %v1282 = vadd.f32 0.0, %v1281
    %v1283 = vpop.f32.mrf.mxu0
    %v1284 = vadd.f32 0.0, %v1283
    %v1285 = vpop.f32.mrf.mxu0
    %v1286 = vadd.f32 0.0, %v1285
    %1287 = vmatprep.mubr.bf16.mxu0 %v1192
    %1288 = vmatmul.mubr.bf16.gmra.mxu0 %v1003
    %v1289 = vpop.f32.mrf.mxu0
    %v1290 = vadd.f32 0.0, %v1289
    %v1291 = vpop.f32.mrf.mxu0
    %v1292 = vadd.f32 0.0, %v1291
    %v1293 = vpop.f32.mrf.mxu0
    %v1294 = vpop.f32.mrf.mxu0
    %1295 = vdwg.mxu0
    %v1296 = vmax.f32 %v1229, 0.0
    %v1297 = vmax.f32 %v1231, 0.0
    %v1298 = vmax.f32 %v1280, 0.0
    %v1299 = vmax.f32 %v1282, 0.0
    %v1300 = vmax.f32 %v1233, 0.0
    %v1301 = vmax.f32 %v1235, 0.0
    %v1302 = vmax.f32 %v1284, 0.0
    %v1303 = vmax.f32 %v1286, 0.0
    %1304 = vst [vmem:[#allocation2 + $0x8] sm:$0xff] %v1296
    %1305 = vst [vmem:[#allocation2 + $0x10] sm:$0xff] %v1297
    %1306 = vst [vmem:[#allocation2 + $0x48] sm:$0xff] %v1300
    %1307 = vst [vmem:[#allocation2 + $0x50] sm:$0xff] %v1301
    %1308 = vst [vmem:[#allocation2 + $0x28] sm:$0xff] %v1298
    %1309 = vst [vmem:[#allocation2 + $0x30] sm:$0xff] %v1299
    %1310 = vst [vmem:[#allocation2 + $0x68] sm:$0xff] %v1302
    %1311 = vst [vmem:[#allocation2 + $0x70] sm:$0xff] %v1303
    %v1312 = vld [vmem:[#allocation2] sm:$0xff]
    %v1313 = vld [vmem:[#allocation2 + $0x8] sm:$0xff]
    %v1314 = vld [vmem:[#allocation2 + $0x10] sm:$0xff]
    %v1315 = vld [vmem:[#allocation2 + $0x40] sm:$0xff]
    %v1316 = vld [vmem:[#allocation2 + $0x48] sm:$0xff]
    %v1317 = vld [vmem:[#allocation2 + $0x50] sm:$0xff]
    %v1318 = vmul.f32 %v1312, %v104
    %v1319 = vmul.f32 %v1313, %v108
    %v1320 = vmul.f32 %v1314, %v106
    %v1321 = vmul.f32 %v1315, %v104
    %v1322 = vmul.f32 %v1316, %v108
    %v1323 = vmul.f32 %v1317, %v106
    %v1324 = vpack.c.bf16 %v1321, %v1318
    %v1325 = vpack.c.bf16 %v1322, %v1319
    %v1326 = vpack.c.bf16 %v1323, %v1320
    %v1330 = vunpack.c.l.b16 %v1324
    %v1331 = vunpack.c.l.b16 %v1325
    %v1332 = vunpack.c.l.b16 %v1326
    %v1333 = vunpack.c.h.b16 %v1324
    %v1334 = vunpack.c.h.b16 %v1325
    %v1335 = vunpack.c.h.b16 %v1326
    %v1336 = vpack.c.b16 %v1331, %v1330
    %v1337 = vpack.c.b16 %v1332, %v1332
    %v1338 = vpack.c.b16 %v1334, %v1333
    %v1339 = vpack.c.b16 %v1335, %v1335
    %1340 = vrot.lane.b32.xlu0 %v1336, 17
    %v1341 = vpop.permute.xlu0 %1340
    %1342 = vrot.lane.b32.xlu0 %v1337, 17
    %v1343 = vpop.permute.xlu0 %1342
    %1344 = vrot.lane.b32.xlu0 %v1338, 17
    %v1345 = vpop.permute.xlu0 %1344
    %1346 = vrot.lane.b32.xlu0 %v1339, 17
    %v1347 = vpop.permute.xlu0 %1346
    %v1348 = vrot.slane %v1341, 4
    %v1349 = vrot.slane %v1343, 4
    %v1350 = vrot.slane %v1345, 4
    %v1351 = vrot.slane %v1347, 4
    %v1352 = vsel %vm146, %v1348, %v1349
    %v1353 = vsel %vm148, %v1341, %v1352
    %v1354 = vsel %vm146, %v1350, %v1351
    %v1355 = vsel %vm148, %v1345, %v1354
    %1358 = vst [vmem:[#allocation3] sm:$0xff] %v1353
    %1359 = vst [vmem:[#allocation3 + $0x10] sm:$0xff] %v1355
    %v1360 = vld [vmem:[#allocation2 + $0x20] sm:$0xff]
    %v1361 = vld [vmem:[#allocation2 + $0x28] sm:$0xff]
    %v1362 = vld [vmem:[#allocation2 + $0x30] sm:$0xff]
    %v1363 = vld [vmem:[#allocation2 + $0x60] sm:$0xff]
    %v1364 = vld [vmem:[#allocation2 + $0x68] sm:$0xff]
    %v1365 = vld [vmem:[#allocation2 + $0x70] sm:$0xff]
    %v1366 = vmul.f32 %v1360, %v104
    %v1367 = vmul.f32 %v1361, %v108
    %v1368 = vmul.f32 %v1362, %v106
    %v1369 = vmul.f32 %v1363, %v104
    %v1370 = vmul.f32 %v1364, %v108
    %v1371 = vmul.f32 %v1365, %v106
    %v1372 = vpack.c.bf16 %v1369, %v1366
    %v1373 = vpack.c.bf16 %v1370, %v1367
    %v1374 = vpack.c.bf16 %v1371, %v1368
    %v1378 = vunpack.c.l.b16 %v1372
    %v1379 = vunpack.c.l.b16 %v1373
    %v1380 = vunpack.c.l.b16 %v1374
    %v1381 = vunpack.c.h.b16 %v1372
    %v1382 = vunpack.c.h.b16 %v1373
    %v1383 = vunpack.c.h.b16 %v1374
    %v1384 = vpack.c.b16 %v1379, %v1378
    %v1385 = vpack.c.b16 %v1380, %v1380
    %v1386 = vpack.c.b16 %v1382, %v1381
    %v1387 = vpack.c.b16 %v1383, %v1383
    %1388 = vrot.lane.b32.xlu0 %v1384, 17
    %v1389 = vpop.permute.xlu0 %1388
    %1390 = vrot.lane.b32.xlu0 %v1385, 17
    %v1391 = vpop.permute.xlu0 %1390
    %1392 = vrot.lane.b32.xlu0 %v1386, 17
    %v1393 = vpop.permute.xlu0 %1392
    %1394 = vrot.lane.b32.xlu0 %v1387, 17
    %v1395 = vpop.permute.xlu0 %1394
    %v1396 = vrot.slane %v1389, 4
    %v1397 = vrot.slane %v1391, 4
    %v1398 = vrot.slane %v1393, 4
    %v1399 = vrot.slane %v1395, 4
    %v1400 = vsel %vm146, %v1396, %v1397
    %v1401 = vsel %vm148, %v1389, %v1400
    %v1402 = vsel %vm146, %v1398, %v1399
    %v1403 = vsel %vm148, %v1393, %v1402
    %1406 = vst [vmem:[#allocation3 + $0x8] sm:$0xff] %v1401
    %1407 = vst [vmem:[#allocation3 + $0x18] sm:$0xff] %v1403
    %v1408 = vld [vmem:[#allocation2] sm:$0xff]
    %v1409 = vld [vmem:[#allocation2 + $0x8] sm:$0xff]
    %v1410 = vld [vmem:[#allocation2 + $0x10] sm:$0xff]
    %v1411 = vld [vmem:[#allocation2 + $0x40] sm:$0xff]
    %v1412 = vld [vmem:[#allocation2 + $0x48] sm:$0xff]
    %v1413 = vld [vmem:[#allocation2 + $0x50] sm:$0xff]
    %v1414 = vpack.c.bf16 %v1411, %v1408
    %v1415 = vpack.c.bf16 %v1412, %v1409
    %v1416 = vpack.c.bf16 %v1413, %v1410
    %v1420 = vunpack.c.l.b16 %v1414
    %v1421 = vunpack.c.l.b16 %v1415
    %v1422 = vunpack.c.l.b16 %v1416
    %v1423 = vunpack.c.h.b16 %v1414
    %v1424 = vunpack.c.h.b16 %v1415
    %v1425 = vunpack.c.h.b16 %v1416
    %v1426 = vpack.c.b16 %v1421, %v1420
    %v1427 = vpack.c.b16 %v1422, %v1422
    %v1428 = vpack.c.b16 %v1424, %v1423
    %v1429 = vpack.c.b16 %v1425, %v1425
    %1430 = vrot.lane.b32.xlu0 %v1426, 16
    %v1431 = vpop.permute.xlu0 %1430
    %1432 = vrot.lane.b32.xlu0 %v1427, 16
    %v1433 = vpop.permute.xlu0 %1432
    %1434 = vrot.lane.b32.xlu0 %v1428, 16
    %v1435 = vpop.permute.xlu0 %1434
    %1436 = vrot.lane.b32.xlu0 %v1429, 16
    %v1437 = vpop.permute.xlu0 %1436
    %v1438 = vrot.slane %v1431, 4
    %v1439 = vrot.slane %v1433, 4
    %v1440 = vrot.slane %v1435, 4
    %v1441 = vrot.slane %v1437, 4
    %v1442 = vsel %vm146, %v1438, %v1439
    %v1443 = vsel %vm239, %v1431, %v1442
    %v1444 = vsel %vm146, %v1440, %v1441
    %v1445 = vsel %vm239, %v1435, %v1444
    %1448 = vst [vmem:[#allocation3 + $0x20] sm:$0xff] %v1443
    %1449 = vst [vmem:[#allocation3 + $0x30] sm:$0xff] %v1445
    %v1450 = vld [vmem:[#allocation2 + $0x20] sm:$0xff]
    %v1451 = vld [vmem:[#allocation2 + $0x28] sm:$0xff]
    %v1452 = vld [vmem:[#allocation2 + $0x30] sm:$0xff]
    %v1453 = vld [vmem:[#allocation2 + $0x60] sm:$0xff]
    %v1454 = vld [vmem:[#allocation2 + $0x68] sm:$0xff]
    %v1455 = vld [vmem:[#allocation2 + $0x70] sm:$0xff]
    %v1456 = vpack.c.bf16 %v1453, %v1450
    %v1457 = vpack.c.bf16 %v1454, %v1451
    %v1458 = vpack.c.bf16 %v1455, %v1452
    %v1462 = vunpack.c.l.b16 %v1456
    %v1463 = vunpack.c.l.b16 %v1457
    %v1464 = vunpack.c.l.b16 %v1458
    %v1465 = vunpack.c.h.b16 %v1456
    %v1466 = vunpack.c.h.b16 %v1457
    %v1467 = vunpack.c.h.b16 %v1458
    %v1468 = vpack.c.b16 %v1463, %v1462
    %v1469 = vpack.c.b16 %v1464, %v1464
    %v1470 = vpack.c.b16 %v1466, %v1465
    %v1471 = vpack.c.b16 %v1467, %v1467
    %1472 = vrot.lane.b32.xlu0 %v1468, 16
    %v1473 = vpop.permute.xlu0 %1472
    %1474 = vrot.lane.b32.xlu0 %v1469, 16
    %v1475 = vpop.permute.xlu0 %1474
    %1476 = vrot.lane.b32.xlu0 %v1470, 16
    %v1477 = vpop.permute.xlu0 %1476
    %1478 = vrot.lane.b32.xlu0 %v1471, 16
    %v1479 = vpop.permute.xlu0 %1478
    %v1480 = vrot.slane %v1473, 4
    %v1481 = vrot.slane %v1475, 4
    %v1482 = vrot.slane %v1477, 4
    %v1483 = vrot.slane %v1479, 4
    %v1484 = vsel %vm146, %v1480, %v1481
    %v1485 = vsel %vm239, %v1473, %v1484
    %v1486 = vsel %vm146, %v1482, %v1483
    %v1487 = vsel %vm239, %v1477, %v1486
    %1490 = vst [vmem:[#allocation3 + $0x28] sm:$0xff] %v1485
    %1491 = vst [vmem:[#allocation3 + $0x38] sm:$0xff] %v1487
    %v1492 = vld [vmem:[#allocation2] sm:$0xff]
    %v1493 = vld [vmem:[#allocation2 + $0x8] sm:$0xff]
    %v1494 = vld [vmem:[#allocation2 + $0x10] sm:$0xff]
    %v1495 = vld [vmem:[#allocation2 + $0x40] sm:$0xff]
    %v1496 = vld [vmem:[#allocation2 + $0x48] sm:$0xff]
    %v1497 = vld [vmem:[#allocation2 + $0x50] sm:$0xff]
    %v1498 = vmul.f32 %v1492, %v305
    %v1499 = vmul.f32 %v1493, %v309
    %v1500 = vmul.f32 %v1494, %v307
    %v1501 = vmul.f32 %v1495, %v305
    %v1502 = vmul.f32 %v1496, %v309
    %v1503 = vmul.f32 %v1497, %v307
    %v1504 = vpack.c.bf16 %v1501, %v1498
    %v1505 = vpack.c.bf16 %v1502, %v1499
    %v1506 = vpack.c.bf16 %v1503, %v1500
    %v1510 = vunpack.c.l.b16 %v1504
    %v1511 = vunpack.c.l.b16 %v1505
    %v1512 = vunpack.c.l.b16 %v1506
    %v1513 = vunpack.c.h.b16 %v1504
    %v1514 = vunpack.c.h.b16 %v1505
    %v1515 = vunpack.c.h.b16 %v1506
    %v1516 = vpack.c.b16 %v1511, %v1510
    %v1517 = vpack.c.b16 %v1512, %v1512
    %v1518 = vpack.c.b16 %v1514, %v1513
    %v1519 = vpack.c.b16 %v1515, %v1515
    %1520 = vrot.lane.b32.xlu0 %v1516, 15
    %v1521 = vpop.permute.xlu0 %1520
    %1522 = vrot.lane.b32.xlu0 %v1517, 15
    %v1523 = vpop.permute.xlu0 %1522
    %1524 = vrot.lane.b32.xlu0 %v1518, 15
    %v1525 = vpop.permute.xlu0 %1524
    %1526 = vrot.lane.b32.xlu0 %v1519, 15
    %v1527 = vpop.permute.xlu0 %1526
    %v1528 = vrot.slane %v1521, 4
    %v1529 = vrot.slane %v1523, 4
    %v1530 = vrot.slane %v1525, 4
    %v1531 = vrot.slane %v1527, 4
    %v1532 = vsel %vm146, %v1528, %v1529
    %v1533 = vsel %vm348, %v1521, %v1532
    %v1534 = vsel %vm146, %v1530, %v1531
    %v1535 = vsel %vm348, %v1525, %v1534
    %1538 = vst [vmem:[#allocation3 + $0x40] sm:$0xff] %v1533
    %1539 = vst [vmem:[#allocation3 + $0x50] sm:$0xff] %v1535
    %v1540 = vld [vmem:[#allocation2 + $0x20] sm:$0xff]
    %v1541 = vld [vmem:[#allocation2 + $0x28] sm:$0xff]
    %v1542 = vld [vmem:[#allocation2 + $0x30] sm:$0xff]
    %v1543 = vld [vmem:[#allocation2 + $0x60] sm:$0xff]
    %v1544 = vld [vmem:[#allocation2 + $0x68] sm:$0xff]
    %v1545 = vld [vmem:[#allocation2 + $0x70] sm:$0xff]
    %v1546 = vmul.f32 %v1540, %v305
    %v1547 = vmul.f32 %v1541, %v309
    %v1548 = vmul.f32 %v1542, %v307
    %v1549 = vmul.f32 %v1543, %v305
    %v1550 = vmul.f32 %v1544, %v309
    %v1551 = vmul.f32 %v1545, %v307
    %v1552 = vpack.c.bf16 %v1549, %v1546
    %v1553 = vpack.c.bf16 %v1550, %v1547
    %v1554 = vpack.c.bf16 %v1551, %v1548
    %v1558 = vunpack.c.l.b16 %v1552
    %v1559 = vunpack.c.l.b16 %v1553
    %v1560 = vunpack.c.l.b16 %v1554
    %v1561 = vunpack.c.h.b16 %v1552
    %v1562 = vunpack.c.h.b16 %v1553
    %v1563 = vunpack.c.h.b16 %v1554
    %v1564 = vpack.c.b16 %v1559, %v1558
    %v1565 = vpack.c.b16 %v1560, %v1560
    %v1566 = vpack.c.b16 %v1562, %v1561
    %v1567 = vpack.c.b16 %v1563, %v1563
    %1568 = vrot.lane.b32.xlu0 %v1564, 15
    %v1569 = vpop.permute.xlu0 %1568
    %1570 = vrot.lane.b32.xlu0 %v1565, 15
    %v1571 = vpop.permute.xlu0 %1570
    %1572 = vrot.lane.b32.xlu0 %v1566, 15
    %v1573 = vpop.permute.xlu0 %1572
    %1574 = vrot.lane.b32.xlu0 %v1567, 15
    %v1575 = vpop.permute.xlu0 %1574
    %v1576 = vrot.slane %v1569, 4
    %v1577 = vrot.slane %v1571, 4
    %v1578 = vrot.slane %v1573, 4
    %v1579 = vrot.slane %v1575, 4
    %v1580 = vsel %vm146, %v1576, %v1577
    %v1581 = vsel %vm348, %v1569, %v1580
    %v1582 = vsel %vm146, %v1578, %v1579
    %v1583 = vsel %vm348, %v1573, %v1582
    %1586 = vst [vmem:[#allocation3 + $0x48] sm:$0xff] %v1581
    %1587 = vst [vmem:[#allocation3 + $0x58] sm:$0xff] %v1583
    %v1588 = vld [vmem:[#allocation2] sm:$0xff]
    %v1589 = vld [vmem:[#allocation2 + $0x8] sm:$0xff]
    %v1590 = vld [vmem:[#allocation2 + $0x10] sm:$0xff]
    %v1591 = vld [vmem:[#allocation2 + $0x40] sm:$0xff]
    %v1592 = vld [vmem:[#allocation2 + $0x48] sm:$0xff]
    %v1593 = vld [vmem:[#allocation2 + $0x50] sm:$0xff]
    %v1594 = vmul.f32 %v1588, %v411
    %v1595 = vmul.f32 %v1589, %v415
    %v1596 = vmul.f32 %v1590, %v413
    %v1597 = vmul.f32 %v1591, %v411
    %v1598 = vmul.f32 %v1592, %v415
    %v1599 = vmul.f32 %v1593, %v413
    %v1600 = vpack.c.bf16 %v1597, %v1594
    %v1601 = vpack.c.bf16 %v1598, %v1595
    %v1602 = vpack.c.bf16 %v1599, %v1596
    %v1606 = vunpack.c.l.b16 %v1600
    %v1607 = vunpack.c.l.b16 %v1601
    %v1608 = vunpack.c.l.b16 %v1602
    %v1609 = vunpack.c.h.b16 %v1600
    %v1610 = vunpack.c.h.b16 %v1601
    %v1611 = vunpack.c.h.b16 %v1602
    %v1612 = vpack.c.b16 %v1607, %v1606
    %v1613 = vpack.c.b16 %v1608, %v1608
    %v1614 = vpack.c.b16 %v1610, %v1609
    %v1615 = vpack.c.b16 %v1611, %v1611
    %1616 = vrot.lane.b32.xlu0 %v1612, 1
    %v1617 = vpop.permute.xlu0 %1616
    %1618 = vrot.lane.b32.xlu0 %v1613, 1
    %v1619 = vpop.permute.xlu0 %1618
    %1620 = vrot.lane.b32.xlu0 %v1614, 1
    %v1621 = vpop.permute.xlu0 %1620
    %1622 = vrot.lane.b32.xlu0 %v1615, 1
    %v1623 = vpop.permute.xlu0 %1622
    %v1624 = vrot.slane %v1617, 4
    %v1625 = vrot.slane %v1619, 4
    %v1626 = vrot.slane %v1621, 4
    %v1627 = vrot.slane %v1623, 4
    %v1628 = vsel %vm146, %v1624, %v1625
    %v1629 = vsel %vm454, %v1617, %v1628
    %v1630 = vsel %vm146, %v1626, %v1627
    %v1631 = vsel %vm454, %v1621, %v1630
    %1634 = vst [vmem:[#allocation3 + $0x60] sm:$0xff] %v1629
    %1635 = vst [vmem:[#allocation3 + $0x70] sm:$0xff] %v1631
    %v1636 = vld [vmem:[#allocation2 + $0x20] sm:$0xff]
    %v1637 = vld [vmem:[#allocation2 + $0x28] sm:$0xff]
    %v1638 = vld [vmem:[#allocation2 + $0x30] sm:$0xff]
    %v1639 = vld [vmem:[#allocation2 + $0x60] sm:$0xff]
    %v1640 = vld [vmem:[#allocation2 + $0x68] sm:$0xff]
    %v1641 = vld [vmem:[#allocation2 + $0x70] sm:$0xff]
    %v1642 = vmul.f32 %v1636, %v411
    %v1643 = vmul.f32 %v1637, %v415
    %v1644 = vmul.f32 %v1638, %v413
    %v1645 = vmul.f32 %v1639, %v411
    %v1646 = vmul.f32 %v1640, %v415
    %v1647 = vmul.f32 %v1641, %v413
    %v1648 = vpack.c.bf16 %v1645, %v1642
    %v1649 = vpack.c.bf16 %v1646, %v1643
    %v1650 = vpack.c.bf16 %v1647, %v1644
    %v1654 = vunpack.c.l.b16 %v1648
    %v1655 = vunpack.c.l.b16 %v1649
    %v1656 = vunpack.c.l.b16 %v1650
    %v1657 = vunpack.c.h.b16 %v1648
    %v1658 = vunpack.c.h.b16 %v1649
    %v1659 = vunpack.c.h.b16 %v1650
    %v1660 = vpack.c.b16 %v1655, %v1654
    %v1661 = vpack.c.b16 %v1656, %v1656
    %v1662 = vpack.c.b16 %v1658, %v1657
    %v1663 = vpack.c.b16 %v1659, %v1659
    %1664 = vrot.lane.b32.xlu0 %v1660, 1
    %v1665 = vpop.permute.xlu0 %1664
    %1666 = vrot.lane.b32.xlu0 %v1661, 1
    %v1667 = vpop.permute.xlu0 %1666
    %1668 = vrot.lane.b32.xlu0 %v1662, 1
    %v1669 = vpop.permute.xlu0 %1668
    %1670 = vrot.lane.b32.xlu0 %v1663, 1
    %v1671 = vpop.permute.xlu0 %1670
    %v1672 = vrot.slane %v1665, 4
    %v1673 = vrot.slane %v1667, 4
    %v1674 = vrot.slane %v1669, 4
    %v1675 = vrot.slane %v1671, 4
    %v1676 = vsel %vm146, %v1672, %v1673
    %v1677 = vsel %vm454, %v1665, %v1676
    %v1678 = vsel %vm146, %v1674, %v1675
    %v1679 = vsel %vm454, %v1669, %v1678
    %1682 = vst [vmem:[#allocation3 + $0x68] sm:$0xff] %v1677
    %1683 = vst [vmem:[#allocation3 + $0x78] sm:$0xff] %v1679
    %v1684 = vld [vmem:[#allocation2 + $0x8] sm:$0xff]
    %v1685 = vld [vmem:[#allocation2 + $0x10] sm:$0xff]
    %v1686 = vld [vmem:[#allocation2 + $0x48] sm:$0xff]
    %v1687 = vld [vmem:[#allocation2 + $0x50] sm:$0xff]
    %v1688 = vpack.c.bf16 %v1686, %v1684
    %v1689 = vpack.c.bf16 %v1687, %v1685
    %v1692 = vunpack.c.l.b16 %v1688
    %v1693 = vunpack.c.l.b16 %v1689
    %v1694 = vunpack.c.h.b16 %v1688
    %v1695 = vunpack.c.h.b16 %v1689
    %v1696 = vpack.c.b16 %v1693, %v1692
    %v1697 = vpack.c.b16 %v1695, %v1694
    %1700 = vst [vmem:[#allocation3 + $0x80] sm:$0xff] %v1696
    %1701 = vst [vmem:[#allocation3 + $0x90] sm:$0xff] %v1697
    %v1702 = vld [vmem:[#allocation2 + $0x28] sm:$0xff]
    %v1703 = vld [vmem:[#allocation2 + $0x30] sm:$0xff]
    %v1704 = vld [vmem:[#allocation2 + $0x68] sm:$0xff]
    %v1705 = vld [vmem:[#allocation2 + $0x70] sm:$0xff]
    %v1706 = vpack.c.bf16 %v1704, %v1702
    %v1707 = vpack.c.bf16 %v1705, %v1703
    %v1710 = vunpack.c.l.b16 %v1706
    %v1711 = vunpack.c.l.b16 %v1707
    %v1712 = vunpack.c.h.b16 %v1706
    %v1713 = vunpack.c.h.b16 %v1707
    %v1714 = vpack.c.b16 %v1711, %v1710
    %v1715 = vpack.c.b16 %v1713, %v1712
    %1718 = vst [vmem:[#allocation3 + $0x88] sm:$0xff] %v1714
    %1719 = vst [vmem:[#allocation3 + $0x98] sm:$0xff] %v1715
    %v1720 = vld [vmem:[#allocation2 + $0x8] sm:$0xff]
    %v1721 = vld [vmem:[#allocation2 + $0x10] sm:$0xff]
    %v1722 = vld [vmem:[#allocation2 + $0x18] sm:$0xff]
    %v1723 = vld [vmem:[#allocation2 + $0x48] sm:$0xff]
    %v1724 = vld [vmem:[#allocation2 + $0x50] sm:$0xff]
    %v1725 = vld [vmem:[#allocation2 + $0x58] sm:$0xff]
    %v1726 = vmul.f32 %v1720, %v553
    %v1727 = vmul.f32 %v1721, %v557
    %v1728 = vmul.f32 %v1722, %v555
    %v1729 = vmul.f32 %v1723, %v553
    %v1730 = vmul.f32 %v1724, %v557
    %v1731 = vmul.f32 %v1725, %v555
    %v1732 = vpack.c.bf16 %v1729, %v1726
    %v1733 = vpack.c.bf16 %v1730, %v1727
    %v1734 = vpack.c.bf16 %v1731, %v1728
    %v1738 = vunpack.c.l.b16 %v1732
    %v1739 = vunpack.c.l.b16 %v1733
    %v1740 = vunpack.c.l.b16 %v1734
    %v1741 = vunpack.c.h.b16 %v1732
    %v1742 = vunpack.c.h.b16 %v1733
    %v1743 = vunpack.c.h.b16 %v1734
    %v1744 = vpack.c.b16 %v1739, %v1738
    %v1745 = vpack.c.b16 %v1740, %v1740
    %v1746 = vpack.c.b16 %v1742, %v1741
    %v1747 = vpack.c.b16 %v1743, %v1743
    %1748 = vrot.lane.b32.xlu0 %v1744, 127
    %v1749 = vpop.permute.xlu0 %1748
    %1750 = vrot.lane.b32.xlu0 %v1745, 127
    %v1751 = vpop.permute.xlu0 %1750
    %1752 = vrot.lane.b32.xlu0 %v1746, 127
    %v1753 = vpop.permute.xlu0 %1752
    %1754 = vrot.lane.b32.xlu0 %v1747, 127
    %v1755 = vpop.permute.xlu0 %1754
    %v1756 = vrot.slane %v1749, 4
    %v1757 = vrot.slane %v1751, 4
    %v1758 = vrot.slane %v1753, 4
    %v1759 = vrot.slane %v1755, 4
    %v1760 = vsel %vm146, %v1756, %v1757
    %v1761 = vsel %vm596, %v1749, %v1760
    %v1762 = vsel %vm146, %v1758, %v1759
    %v1763 = vsel %vm596, %v1753, %v1762
    %1766 = vst [vmem:[#allocation3 + $0xa0] sm:$0xff] %v1761
    %1767 = vst [vmem:[#allocation3 + $0xb0] sm:$0xff] %v1763
    %v1768 = vld [vmem:[#allocation2 + $0x28] sm:$0xff]
    %v1769 = vld [vmem:[#allocation2 + $0x30] sm:$0xff]
    %v1770 = vld [vmem:[#allocation2 + $0x38] sm:$0xff]
    %v1771 = vld [vmem:[#allocation2 + $0x68] sm:$0xff]
    %v1772 = vld [vmem:[#allocation2 + $0x70] sm:$0xff]
    %v1773 = vld [vmem:[#allocation2 + $0x78] sm:$0xff]
    %v1774 = vmul.f32 %v1768, %v553
    %v1775 = vmul.f32 %v1769, %v557
    %v1776 = vmul.f32 %v1770, %v555
    %v1777 = vmul.f32 %v1771, %v553
    %v1778 = vmul.f32 %v1772, %v557
    %v1779 = vmul.f32 %v1773, %v555
    %v1780 = vpack.c.bf16 %v1777, %v1774
    %v1781 = vpack.c.bf16 %v1778, %v1775
    %v1782 = vpack.c.bf16 %v1779, %v1776
    %v1786 = vunpack.c.l.b16 %v1780
    %v1787 = vunpack.c.l.b16 %v1781
    %v1788 = vunpack.c.l.b16 %v1782
    %v1789 = vunpack.c.h.b16 %v1780
    %v1790 = vunpack.c.h.b16 %v1781
    %v1791 = vunpack.c.h.b16 %v1782
    %v1792 = vpack.c.b16 %v1787, %v1786
    %v1793 = vpack.c.b16 %v1788, %v1788
    %v1794 = vpack.c.b16 %v1790, %v1789
    %v1795 = vpack.c.b16 %v1791, %v1791
    %1796 = vrot.lane.b32.xlu0 %v1792, 127
    %v1797 = vpop.permute.xlu0 %1796
    %1798 = vrot.lane.b32.xlu0 %v1793, 127
    %v1799 = vpop.permute.xlu0 %1798
    %1800 = vrot.lane.b32.xlu0 %v1794, 127
    %v1801 = vpop.permute.xlu0 %1800
    %1802 = vrot.lane.b32.xlu0 %v1795, 127
    %v1803 = vpop.permute.xlu0 %1802
    %v1804 = vrot.slane %v1797, 4
    %v1805 = vrot.slane %v1799, 4
    %v1806 = vrot.slane %v1801, 4
    %v1807 = vrot.slane %v1803, 4
    %v1808 = vsel %vm146, %v1804, %v1805
    %v1809 = vsel %vm596, %v1797, %v1808
    %v1810 = vsel %vm146, %v1806, %v1807
    %v1811 = vsel %vm596, %v1801, %v1810
    %1814 = vst [vmem:[#allocation3 + $0xa8] sm:$0xff] %v1809
    %1815 = vst [vmem:[#allocation3 + $0xb8] sm:$0xff] %v1811
    %v1816 = vld [vmem:[#allocation2 + $0x8] sm:$0xff]
    %v1817 = vld [vmem:[#allocation2 + $0x10] sm:$0xff]
    %v1818 = vld [vmem:[#allocation2 + $0x18] sm:$0xff]
    %v1819 = vld [vmem:[#allocation2 + $0x48] sm:$0xff]
    %v1820 = vld [vmem:[#allocation2 + $0x50] sm:$0xff]
    %v1821 = vld [vmem:[#allocation2 + $0x58] sm:$0xff]
    %v1822 = vmul.f32 %v1816, %v659
    %v1823 = vmul.f32 %v1817, %v663
    %v1824 = vmul.f32 %v1818, %v661
    %v1825 = vmul.f32 %v1819, %v659
    %v1826 = vmul.f32 %v1820, %v663
    %v1827 = vmul.f32 %v1821, %v661
    %v1828 = vpack.c.bf16 %v1825, %v1822
    %v1829 = vpack.c.bf16 %v1826, %v1823
    %v1830 = vpack.c.bf16 %v1827, %v1824
    %v1834 = vunpack.c.l.b16 %v1828
    %v1835 = vunpack.c.l.b16 %v1829
    %v1836 = vunpack.c.l.b16 %v1830
    %v1837 = vunpack.c.h.b16 %v1828
    %v1838 = vunpack.c.h.b16 %v1829
    %v1839 = vunpack.c.h.b16 %v1830
    %v1840 = vpack.c.b16 %v1835, %v1834
    %v1841 = vpack.c.b16 %v1836, %v1836
    %v1842 = vpack.c.b16 %v1838, %v1837
    %v1843 = vpack.c.b16 %v1839, %v1839
    %1844 = vrot.lane.b32.xlu0 %v1840, 113
    %v1845 = vpop.permute.xlu0 %1844
    %1846 = vrot.lane.b32.xlu0 %v1841, 113
    %v1847 = vpop.permute.xlu0 %1846
    %1848 = vrot.lane.b32.xlu0 %v1842, 113
    %v1849 = vpop.permute.xlu0 %1848
    %1850 = vrot.lane.b32.xlu0 %v1843, 113
    %v1851 = vpop.permute.xlu0 %1850
    %v1852 = vrot.slane %v1845, 4
    %v1853 = vrot.slane %v1847, 4
    %v1854 = vrot.slane %v1849, 4
    %v1855 = vrot.slane %v1851, 4
    %v1856 = vsel %vm146, %v1852, %v1853
    %v1857 = vsel %vm702, %v1845, %v1856
    %v1858 = vsel %vm146, %v1854, %v1855
    %v1859 = vsel %vm702, %v1849, %v1858
    %1862 = vst [vmem:[#allocation3 + $0xc0] sm:$0xff] %v1857
    %1863 = vst [vmem:[#allocation3 + $0xd0] sm:$0xff] %v1859
    %v1864 = vld [vmem:[#allocation2 + $0x28] sm:$0xff]
    %v1865 = vld [vmem:[#allocation2 + $0x30] sm:$0xff]
    %v1866 = vld [vmem:[#allocation2 + $0x38] sm:$0xff]
    %v1867 = vld [vmem:[#allocation2 + $0x68] sm:$0xff]
    %v1868 = vld [vmem:[#allocation2 + $0x70] sm:$0xff]
    %v1869 = vld [vmem:[#allocation2 + $0x78] sm:$0xff]
    %v1870 = vmul.f32 %v1864, %v659
    %v1871 = vmul.f32 %v1865, %v663
    %v1872 = vmul.f32 %v1866, %v661
    %v1873 = vmul.f32 %v1867, %v659
    %v1874 = vmul.f32 %v1868, %v663
    %v1875 = vmul.f32 %v1869, %v661
    %v1876 = vpack.c.bf16 %v1873, %v1870
    %v1877 = vpack.c.bf16 %v1874, %v1871
    %v1878 = vpack.c.bf16 %v1875, %v1872
    %v1882 = vunpack.c.l.b16 %v1876
    %v1883 = vunpack.c.l.b16 %v1877
    %v1884 = vunpack.c.l.b16 %v1878
    %v1885 = vunpack.c.h.b16 %v1876
    %v1886 = vunpack.c.h.b16 %v1877
    %v1887 = vunpack.c.h.b16 %v1878
    %v1888 = vpack.c.b16 %v1883, %v1882
    %v1889 = vpack.c.b16 %v1884, %v1884
    %v1890 = vpack.c.b16 %v1886, %v1885
    %v1891 = vpack.c.b16 %v1887, %v1887
    %1892 = vrot.lane.b32.xlu0 %v1888, 113
    %v1893 = vpop.permute.xlu0 %1892
    %1894 = vrot.lane.b32.xlu0 %v1889, 113
    %v1895 = vpop.permute.xlu0 %1894
    %1896 = vrot.lane.b32.xlu0 %v1890, 113
    %v1897 = vpop.permute.xlu0 %1896
    %1898 = vrot.lane.b32.xlu0 %v1891, 113
    %v1899 = vpop.permute.xlu0 %1898
    %v1900 = vrot.slane %v1893, 4
    %v1901 = vrot.slane %v1895, 4
    %v1902 = vrot.slane %v1897, 4
    %v1903 = vrot.slane %v1899, 4
    %v1904 = vsel %vm146, %v1900, %v1901
    %v1905 = vsel %vm702, %v1893, %v1904
    %v1906 = vsel %vm146, %v1902, %v1903
    %v1907 = vsel %vm702, %v1897, %v1906
    %1910 = vst [vmem:[#allocation3 + $0xc8] sm:$0xff] %v1905
    %1911 = vst [vmem:[#allocation3 + $0xd8] sm:$0xff] %v1907
    %v1912 = vld [vmem:[#allocation2 + $0x8] sm:$0xff]
    %v1913 = vld [vmem:[#allocation2 + $0x10] sm:$0xff]
    %v1914 = vld [vmem:[#allocation2 + $0x18] sm:$0xff]
    %v1915 = vld [vmem:[#allocation2 + $0x48] sm:$0xff]
    %v1916 = vld [vmem:[#allocation2 + $0x50] sm:$0xff]
    %v1917 = vld [vmem:[#allocation2 + $0x58] sm:$0xff]
    %v1918 = vpack.c.bf16 %v1915, %v1912
    %v1919 = vpack.c.bf16 %v1916, %v1913
    %v1920 = vpack.c.bf16 %v1917, %v1914
    %v1924 = vunpack.c.l.b16 %v1918
    %v1925 = vunpack.c.l.b16 %v1919
    %v1926 = vunpack.c.l.b16 %v1920
    %v1927 = vunpack.c.h.b16 %v1918
    %v1928 = vunpack.c.h.b16 %v1919
    %v1929 = vunpack.c.h.b16 %v1920
    %v1930 = vpack.c.b16 %v1925, %v1924
    %v1931 = vpack.c.b16 %v1926, %v1926
    %v1932 = vpack.c.b16 %v1928, %v1927
    %v1933 = vpack.c.b16 %v1929, %v1929
    %1934 = vrot.lane.b32.xlu0 %v1930, 112
    %v1935 = vpop.permute.xlu0 %1934
    %1936 = vrot.lane.b32.xlu0 %v1931, 112
    %v1937 = vpop.permute.xlu0 %1936
    %1938 = vrot.lane.b32.xlu0 %v1932, 112
    %v1939 = vpop.permute.xlu0 %1938
    %1940 = vrot.lane.b32.xlu0 %v1933, 112
    %v1941 = vpop.permute.xlu0 %1940
    %v1942 = vrot.slane %v1935, 4
    %v1943 = vrot.slane %v1937, 4
    %v1944 = vrot.slane %v1939, 4
    %v1945 = vrot.slane %v1941, 4
    %v1946 = vsel %vm146, %v1942, %v1943
    %v1947 = vsel %vm793, %v1935, %v1946
    %v1948 = vsel %vm146, %v1944, %v1945
    %v1949 = vsel %vm793, %v1939, %v1948
    %1952 = vst [vmem:[#allocation3 + $0xe0] sm:$0xff] %v1947
    %1953 = vst [vmem:[#allocation3 + $0xf0] sm:$0xff] %v1949
    %v1954 = vld [vmem:[#allocation2 + $0x28] sm:$0xff]
    %v1955 = vld [vmem:[#allocation2 + $0x30] sm:$0xff]
    %v1956 = vld [vmem:[#allocation2 + $0x38] sm:$0xff]
    %v1957 = vld [vmem:[#allocation2 + $0x68] sm:$0xff]
    %v1958 = vld [vmem:[#allocation2 + $0x70] sm:$0xff]
    %v1959 = vld [vmem:[#allocation2 + $0x78] sm:$0xff]
    %v1960 = vpack.c.bf16 %v1957, %v1954
    %v1961 = vpack.c.bf16 %v1958, %v1955
    %v1962 = vpack.c.bf16 %v1959, %v1956
    %v1966 = vunpack.c.l.b16 %v1960
    %v1967 = vunpack.c.l.b16 %v1961
    %v1968 = vunpack.c.l.b16 %v1962
    %v1969 = vunpack.c.h.b16 %v1960
    %v1970 = vunpack.c.h.b16 %v1961
    %v1971 = vunpack.c.h.b16 %v1962
    %v1972 = vpack.c.b16 %v1967, %v1966
    %v1973 = vpack.c.b16 %v1968, %v1968
    %v1974 = vpack.c.b16 %v1970, %v1969
    %v1975 = vpack.c.b16 %v1971, %v1971
    %1976 = vrot.lane.b32.xlu0 %v1972, 112
    %v1977 = vpop.permute.xlu0 %1976
    %1978 = vrot.lane.b32.xlu0 %v1973, 112
    %v1979 = vpop.permute.xlu0 %1978
    %1980 = vrot.lane.b32.xlu0 %v1974, 112
    %v1981 = vpop.permute.xlu0 %1980
    %1982 = vrot.lane.b32.xlu0 %v1975, 112
    %v1983 = vpop.permute.xlu0 %1982
    %v1984 = vrot.slane %v1977, 4
    %v1985 = vrot.slane %v1979, 4
    %v1986 = vrot.slane %v1981, 4
    %v1987 = vrot.slane %v1983, 4
    %v1988 = vsel %vm146, %v1984, %v1985
    %v1989 = vsel %vm793, %v1977, %v1988
    %v1990 = vsel %vm146, %v1986, %v1987
    %v1991 = vsel %vm793, %v1981, %v1990
    %1994 = vst [vmem:[#allocation3 + $0xe8] sm:$0xff] %v1989
    %1995 = vst [vmem:[#allocation3 + $0xf8] sm:$0xff] %v1991
    %v1996 = vld [vmem:[#allocation2 + $0x8] sm:$0xff]
    %v1997 = vld [vmem:[#allocation2 + $0x10] sm:$0xff]
    %v1998 = vld [vmem:[#allocation2 + $0x18] sm:$0xff]
    %v1999 = vld [vmem:[#allocation2 + $0x48] sm:$0xff]
    %v2000 = vld [vmem:[#allocation2 + $0x50] sm:$0xff]
    %v2001 = vld [vmem:[#allocation2 + $0x58] sm:$0xff]
    %v2002 = vmul.f32 %v1996, %v850
    %v2003 = vmul.f32 %v1997, %v854
    %v2004 = vmul.f32 %v1998, %v852
    %v2005 = vmul.f32 %v1999, %v850
    %v2006 = vmul.f32 %v2000, %v854
    %v2007 = vmul.f32 %v2001, %v852
    %v2008 = vpack.c.bf16 %v2005, %v2002
    %v2009 = vpack.c.bf16 %v2006, %v2003
    %v2010 = vpack.c.bf16 %v2007, %v2004
    %v2014 = vunpack.c.l.b16 %v2008
    %v2015 = vunpack.c.l.b16 %v2009
    %v2016 = vunpack.c.l.b16 %v2010
    %v2017 = vunpack.c.h.b16 %v2008
    %v2018 = vunpack.c.h.b16 %v2009
    %v2019 = vunpack.c.h.b16 %v2010
    %v2020 = vpack.c.b16 %v2015, %v2014
    %v2021 = vpack.c.b16 %v2016, %v2016
    %v2022 = vpack.c.b16 %v2018, %v2017
    %v2023 = vpack.c.b16 %v2019, %v2019
    %2024 = vrot.lane.b32.xlu0 %v2020, 111
    %v2025 = vpop.permute.xlu0 %2024
    %2026 = vrot.lane.b32.xlu0 %v2021, 111
    %v2027 = vpop.permute.xlu0 %2026
    %2028 = vrot.lane.b32.xlu0 %v2022, 111
    %v2029 = vpop.permute.xlu0 %2028
    %2030 = vrot.lane.b32.xlu0 %v2023, 111
    %v2031 = vpop.permute.xlu0 %2030
    %v2032 = vrot.slane %v2025, 4
    %v2033 = vrot.slane %v2027, 4
    %v2034 = vrot.slane %v2029, 4
    %v2035 = vrot.slane %v2031, 4
    %v2036 = vsel %vm146, %v2032, %v2033
    %v2037 = vsel %vm893, %v2025, %v2036
    %v2038 = vsel %vm146, %v2034, %v2035
    %v2039 = vsel %vm893, %v2029, %v2038
    %2042 = vst [vmem:[#allocation3 + $0x100] sm:$0xff] %v2037
    %2043 = vst [vmem:[#allocation3 + $0x110] sm:$0xff] %v2039
    %v2044 = vld [vmem:[#allocation2 + $0x28] sm:$0xff]
    %v2045 = vld [vmem:[#allocation2 + $0x30] sm:$0xff]
    %v2046 = vld [vmem:[#allocation2 + $0x38] sm:$0xff]
    %v2047 = vld [vmem:[#allocation2 + $0x68] sm:$0xff]
    %v2048 = vld [vmem:[#allocation2 + $0x70] sm:$0xff]
    %v2049 = vld [vmem:[#allocation2 + $0x78] sm:$0xff]
    %v2050 = vmul.f32 %v2044, %v850
    %v2051 = vmul.f32 %v2045, %v854
    %v2052 = vmul.f32 %v2046, %v852
    %v2053 = vmul.f32 %v2047, %v850
    %v2054 = vmul.f32 %v2048, %v854
    %v2055 = vmul.f32 %v2049, %v852
    %v2056 = vpack.c.bf16 %v2053, %v2050
    %v2057 = vpack.c.bf16 %v2054, %v2051
    %v2058 = vpack.c.bf16 %v2055, %v2052
    %v2062 = vunpack.c.l.b16 %v2056
    %v2063 = vunpack.c.l.b16 %v2057
    %v2064 = vunpack.c.l.b16 %v2058
    %v2065 = vunpack.c.h.b16 %v2056
    %v2066 = vunpack.c.h.b16 %v2057
    %v2067 = vunpack.c.h.b16 %v2058
    %v2068 = vpack.c.b16 %v2063, %v2062
    %v2069 = vpack.c.b16 %v2064, %v2064
    %v2070 = vpack.c.b16 %v2066, %v2065
    %v2071 = vpack.c.b16 %v2067, %v2067
    %2072 = vrot.lane.b32.xlu0 %v2068, 111
    %v2073 = vpop.permute.xlu0 %2072
    %2074 = vrot.lane.b32.xlu0 %v2069, 111
    %v2075 = vpop.permute.xlu0 %2074
    %2076 = vrot.lane.b32.xlu0 %v2070, 111
    %v2077 = vpop.permute.xlu0 %2076
    %2078 = vrot.lane.b32.xlu0 %v2071, 111
    %v2079 = vpop.permute.xlu0 %2078
    %v2080 = vrot.slane %v2073, 4
    %v2081 = vrot.slane %v2075, 4
    %v2082 = vrot.slane %v2077, 4
    %v2083 = vrot.slane %v2079, 4
    %v2084 = vsel %vm146, %v2080, %v2081
    %v2085 = vsel %vm893, %v2073, %v2084
    %v2086 = vsel %vm146, %v2082, %v2083
    %v2087 = vsel %vm893, %v2077, %v2086
    %2090 = vst [vmem:[#allocation3 + $0x108] sm:$0xff] %v2085
    %2091 = vst [vmem:[#allocation3 + $0x118] sm:$0xff] %v2087
    %v2092 = vld [vmem:[#allocation9] sm:$0xff]
    %v2093 = vld [vmem:[#allocation9 + $0x8] sm:$0xff]
    %v2094 = vld [vmem:[#allocation3] sm:$0xff]
    %v2095 = vld [vmem:[#allocation3 + $0x8] sm:$0xff]
    %v2096 = vld [vmem:[#allocation3 + $0x10] sm:$0xff]
    %v2097 = vld [vmem:[#allocation3 + $0x18] sm:$0xff]
    %v2098 = vld [vmem:[#allocation3 + $0x20] sm:$0xff]
    %v2099 = vld [vmem:[#allocation3 + $0x28] sm:$0xff]
    %v2100 = vld [vmem:[#allocation3 + $0x30] sm:$0xff]
    %v2101 = vld [vmem:[#allocation3 + $0x38] sm:$0xff]
    %v2102 = vld [vmem:[#allocation3 + $0x40] sm:$0xff]
    %v2103 = vld [vmem:[#allocation3 + $0x48] sm:$0xff]
    %v2104 = vld [vmem:[#allocation3 + $0x50] sm:$0xff]
    %v2105 = vld [vmem:[#allocation3 + $0x58] sm:$0xff]
    %v2106 = vld [vmem:[#allocation3 + $0x60] sm:$0xff]
    %v2107 = vld [vmem:[#allocation3 + $0x68] sm:$0xff]
    %v2108 = vld [vmem:[#allocation3 + $0x70] sm:$0xff]
    %v2109 = vld [vmem:[#allocation3 + $0x78] sm:$0xff]
    %v2110 = vld [vmem:[#allocation3 + $0x80] sm:$0xff]
    %v2111 = vld [vmem:[#allocation3 + $0x88] sm:$0xff]
    %v2112 = vld [vmem:[#allocation3 + $0x90] sm:$0xff]
    %v2113 = vld [vmem:[#allocation3 + $0x98] sm:$0xff]
    %v2114 = vld [vmem:[#allocation3 + $0xa0] sm:$0xff]
    %v2115 = vld [vmem:[#allocation3 + $0xa8] sm:$0xff]
    %v2116 = vld [vmem:[#allocation3 + $0xb0] sm:$0xff]
    %v2117 = vld [vmem:[#allocation3 + $0xb8] sm:$0xff]
    %v2118 = vld [vmem:[#allocation3 + $0xc0] sm:$0xff]
    %v2119 = vld [vmem:[#allocation3 + $0xc8] sm:$0xff]
    %v2120 = vld [vmem:[#allocation3 + $0xd0] sm:$0xff]
    %v2121 = vld [vmem:[#allocation3 + $0xd8] sm:$0xff]
    %v2122 = vld [vmem:[#allocation3 + $0xe0] sm:$0xff]
    %v2123 = vld [vmem:[#allocation3 + $0xe8] sm:$0xff]
    %v2124 = vld [vmem:[#allocation3 + $0xf0] sm:$0xff]
    %v2125 = vld [vmem:[#allocation3 + $0xf8] sm:$0xff]
    %v2126 = vld [vmem:[#allocation3 + $0x100] sm:$0xff]
    %v2127 = vld [vmem:[#allocation3 + $0x108] sm:$0xff]
    %v2128 = vld [vmem:[#allocation3 + $0x110] sm:$0xff]
    %v2129 = vld [vmem:[#allocation3 + $0x118] sm:$0xff]
    %v2132 = vunpack.c.l.b16 %v2092
    %v2133 = vunpack.c.h.b16 %v2092
    %v2134 = vunpack.c.l.b16 %v2093
    %v2135 = vunpack.c.h.b16 %v2093
    %v2136 = vpack.c.b16 %v2134, %v2132
    %v2137 = vpack.c.b16 %v2135, %v2133
    %v2175 = vunpack.c.l.b16 %v2094
    %v2176 = vunpack.c.h.b16 %v2094
    %v2177 = vunpack.c.l.b16 %v2095
    %v2178 = vunpack.c.h.b16 %v2095
    %v2179 = vunpack.c.l.b16 %v2096
    %v2180 = vunpack.c.h.b16 %v2096
    %v2181 = vunpack.c.l.b16 %v2097
    %v2182 = vunpack.c.h.b16 %v2097
    %v2183 = vunpack.c.l.b16 %v2098
    %v2184 = vunpack.c.h.b16 %v2098
    %v2185 = vunpack.c.l.b16 %v2099
    %v2186 = vunpack.c.h.b16 %v2099
    %v2187 = vunpack.c.l.b16 %v2100
    %v2188 = vunpack.c.h.b16 %v2100
    %v2189 = vunpack.c.l.b16 %v2101
    %v2190 = vunpack.c.h.b16 %v2101
    %v2191 = vunpack.c.l.b16 %v2102
    %v2192 = vunpack.c.h.b16 %v2102
    %v2193 = vunpack.c.l.b16 %v2103
    %v2194 = vunpack.c.h.b16 %v2103
    %v2195 = vunpack.c.l.b16 %v2104
    %v2196 = vunpack.c.h.b16 %v2104
    %v2197 = vunpack.c.l.b16 %v2105
    %v2198 = vunpack.c.h.b16 %v2105
    %v2199 = vunpack.c.l.b16 %v2106
    %v2200 = vunpack.c.h.b16 %v2106
    %v2201 = vunpack.c.l.b16 %v2107
    %v2202 = vunpack.c.h.b16 %v2107
    %v2203 = vunpack.c.l.b16 %v2108
    %v2204 = vunpack.c.h.b16 %v2108
    %v2205 = vunpack.c.l.b16 %v2109
    %v2206 = vunpack.c.h.b16 %v2109
    %v2207 = vunpack.c.l.b16 %v2110
    %v2208 = vunpack.c.h.b16 %v2110
    %v2209 = vunpack.c.l.b16 %v2111
    %v2210 = vunpack.c.h.b16 %v2111
    %v2211 = vunpack.c.l.b16 %v2112
    %v2212 = vunpack.c.h.b16 %v2112
    %v2213 = vunpack.c.l.b16 %v2113
    %v2214 = vunpack.c.h.b16 %v2113
    %v2215 = vunpack.c.l.b16 %v2114
    %v2216 = vunpack.c.h.b16 %v2114
    %v2217 = vunpack.c.l.b16 %v2115
    %v2218 = vunpack.c.h.b16 %v2115
    %v2219 = vunpack.c.l.b16 %v2116
    %v2220 = vunpack.c.h.b16 %v2116
    %v2221 = vunpack.c.l.b16 %v2117
    %v2222 = vunpack.c.h.b16 %v2117
    %v2223 = vunpack.c.l.b16 %v2118
    %v2224 = vunpack.c.h.b16 %v2118
    %v2225 = vunpack.c.l.b16 %v2119
    %v2226 = vunpack.c.h.b16 %v2119
    %v2227 = vunpack.c.l.b16 %v2120
    %v2228 = vunpack.c.h.b16 %v2120
    %v2229 = vunpack.c.l.b16 %v2121
    %v2230 = vunpack.c.h.b16 %v2121
    %v2231 = vunpack.c.l.b16 %v2122
    %v2232 = vunpack.c.h.b16 %v2122
    %v2233 = vunpack.c.l.b16 %v2123
    %v2234 = vunpack.c.h.b16 %v2123
    %v2235 = vunpack.c.l.b16 %v2124
    %v2236 = vunpack.c.h.b16 %v2124
    %v2237 = vunpack.c.l.b16 %v2125
    %v2238 = vunpack.c.h.b16 %v2125
    %v2239 = vunpack.c.l.b16 %v2126
    %v2240 = vunpack.c.h.b16 %v2126
    %v2241 = vunpack.c.l.b16 %v2127
    %v2242 = vunpack.c.h.b16 %v2127
    %v2243 = vunpack.c.l.b16 %v2128
    %v2244 = vunpack.c.h.b16 %v2128
    %v2245 = vunpack.c.l.b16 %v2129
    %v2246 = vunpack.c.h.b16 %v2129
    %v2247 = vpack.c.b16 %v2179, %v2175
    %v2248 = vpack.c.b16 %v2180, %v2176
    %v2249 = vpack.c.b16 %v2181, %v2177
    %v2250 = vpack.c.b16 %v2182, %v2178
    %v2251 = vpack.c.b16 %v2187, %v2183
    %v2252 = vpack.c.b16 %v2188, %v2184
    %v2253 = vpack.c.b16 %v2189, %v2185
    %v2254 = vpack.c.b16 %v2190, %v2186
    %v2255 = vpack.c.b16 %v2195, %v2191
    %v2256 = vpack.c.b16 %v2196, %v2192
    %v2257 = vpack.c.b16 %v2197, %v2193
    %v2258 = vpack.c.b16 %v2198, %v2194
    %v2259 = vpack.c.b16 %v2203, %v2199
    %v2260 = vpack.c.b16 %v2204, %v2200
    %v2261 = vpack.c.b16 %v2205, %v2201
    %v2262 = vpack.c.b16 %v2206, %v2202
    %v2263 = vpack.c.b16 %v2211, %v2207
    %v2264 = vpack.c.b16 %v2212, %v2208
    %v2265 = vpack.c.b16 %v2213, %v2209
    %v2266 = vpack.c.b16 %v2214, %v2210
    %v2267 = vpack.c.b16 %v2219, %v2215
    %v2268 = vpack.c.b16 %v2220, %v2216
    %v2269 = vpack.c.b16 %v2221, %v2217
    %v2270 = vpack.c.b16 %v2222, %v2218
    %v2271 = vpack.c.b16 %v2227, %v2223
    %v2272 = vpack.c.b16 %v2228, %v2224
    %v2273 = vpack.c.b16 %v2229, %v2225
    %v2274 = vpack.c.b16 %v2230, %v2226
    %v2275 = vpack.c.b16 %v2235, %v2231
    %v2276 = vpack.c.b16 %v2236, %v2232
    %v2277 = vpack.c.b16 %v2237, %v2233
    %v2278 = vpack.c.b16 %v2238, %v2234
    %v2279 = vpack.c.b16 %v2243, %v2239
    %v2280 = vpack.c.b16 %v2244, %v2240
    %v2281 = vpack.c.b16 %v2245, %v2241
    %v2282 = vpack.c.b16 %v2246, %v2242
    %v2320 = vsel %vm1187, %v2137, 0
    %2322 = vmatprep.subr.bf16.mxu0 %v2276
    %2323 = vmatpush1.bf16.msra.mxu0 %v2275
    %2324 = vmatprep.subr.bf16.mxu0 %v2272
    %2325 = vmatpush1.bf16.msra.mxu0 %v2271
    %2326 = vmatprep.subr.bf16.mxu0 %v2268
    %2327 = vmatpush1.bf16.msra.mxu0 %v2267
    %2328 = vmatprep.subr.bf16.mxu0 %v2264
    %2329 = vmatpush1.bf16.msra.mxu0 %v2263
    %2330 = vmatprep.subr.bf16.mxu0 %v2260
    %2331 = vmatpush1.bf16.msra.mxu0 %v2259
    %2332 = vmatprep.subr.bf16.mxu0 %v2256
    %2333 = vmatpush1.bf16.msra.mxu0 %v2255
    %2334 = vmatprep.subr.bf16.mxu0 %v2252
    %2335 = vmatpush1.bf16.msra.mxu0 %v2251
    %2336 = vmatprep.subr.bf16.mxu0 %v2248
    %2337 = vmatpush1.bf16.msra.mxu0 %v2247
    %2338 = vmatprep.subr.bf16.mxu0 0
    %2339 = vmatpush2.bf16.msra.mxu0 0
    %2340 = vmatprep.subr.bf16.mxu0 0
    %2341 = vmatpush2.bf16.msra.mxu0 0
    %2342 = vmatprep.subr.bf16.mxu0 0
    %2343 = vmatpush2.bf16.msra.mxu0 0
    %2344 = vmatprep.subr.bf16.mxu0 0
    %2345 = vmatpush2.bf16.msra.mxu0 0
    %2346 = vmatprep.subr.bf16.mxu0 0
    %2347 = vmatpush2.bf16.msra.mxu0 0
    %2348 = vmatprep.subr.bf16.mxu0 0
    %2349 = vmatpush2.bf16.msra.mxu0 0
    %2350 = vmatprep.subr.bf16.mxu0 0
    %2351 = vmatpush2.bf16.msra.mxu0 0
    %2352 = vmatprep.subr.bf16.mxu0 %v2280
    %2353 = vmatpush2.bf16.msra.mxu0 %v2279
    %2354 = vmatprep.mubr.bf16.mxu0 %v2320
    %2355 = vmatmul.mubr.bf16.gmra.mxu0 %v2136
    %v2356 = vpop.f32.mrf.mxu0
    %v2357 = vadd.f32 %v1239, %v2356
    %v2358 = vpop.f32.mrf.mxu0
    %v2359 = vadd.f32 %v1241, %v2358
    %v2360 = vpop.f32.mrf.mxu0
    %v2361 = vpop.f32.mrf.mxu0
    %2362 = vdwg.mxu0
    %2363 = vmatprep.subr.bf16.mxu0 %v2278
    %2364 = vmatpush1.bf16.msra.mxu0 %v2277
    %2365 = vmatprep.subr.bf16.mxu0 %v2274
    %2366 = vmatpush1.bf16.msra.mxu0 %v2273
    %2367 = vmatprep.subr.bf16.mxu0 %v2270
    %2368 = vmatpush1.bf16.msra.mxu0 %v2269
    %2369 = vmatprep.subr.bf16.mxu0 %v2266
    %2370 = vmatpush1.bf16.msra.mxu0 %v2265
    %2371 = vmatprep.subr.bf16.mxu0 %v2262
    %2372 = vmatpush1.bf16.msra.mxu0 %v2261
    %2373 = vmatprep.subr.bf16.mxu0 %v2258
    %2374 = vmatpush1.bf16.msra.mxu0 %v2257
    %2375 = vmatprep.subr.bf16.mxu0 %v2254
    %2376 = vmatpush1.bf16.msra.mxu0 %v2253
    %2377 = vmatprep.subr.bf16.mxu0 %v2250
    %2378 = vmatpush1.bf16.msra.mxu0 %v2249
    %2379 = vmatprep.subr.bf16.mxu0 0
    %2380 = vmatpush2.bf16.msra.mxu0 0
    %2381 = vmatprep.subr.bf16.mxu0 0
    %2382 = vmatpush2.bf16.msra.mxu0 0
    %2383 = vmatprep.subr.bf16.mxu0 0
    %2384 = vmatpush2.bf16.msra.mxu0 0
    %2385 = vmatprep.subr.bf16.mxu0 0
    %2386 = vmatpush2.bf16.msra.mxu0 0
    %2387 = vmatprep.subr.bf16.mxu0 0
    %2388 = vmatpush2.bf16.msra.mxu0 0
    %2389 = vmatprep.subr.bf16.mxu0 0
    %2390 = vmatpush2.bf16.msra.mxu0 0
    %2391 = vmatprep.subr.bf16.mxu0 0
    %2392 = vmatpush2.bf16.msra.mxu0 0
    %2393 = vmatprep.subr.bf16.mxu0 %v2282
    %2394 = vmatpush2.bf16.msra.mxu0 %v2281
    %2395 = vmatprep.mubr.bf16.mxu0 %v2320
    %2396 = vmatmul.mubr.bf16.gmra.mxu0 %v2136
    %v2397 = vpop.f32.mrf.mxu0
    %v2398 = vadd.f32 %v1290, %v2397
    %v2399 = vpop.f32.mrf.mxu0
    %v2400 = vadd.f32 %v1292, %v2399
    %v2401 = vpop.f32.mrf.mxu0
    %v2402 = vpop.f32.mrf.mxu0
    %2403 = vdwg.mxu0
    %v2404 = vmax.f32 %v2357, 0.0
    %v2405 = vmax.f32 %v2359, 0.0
    %v2406 = vmax.f32 %v2398, 0.0
    %v2407 = vmax.f32 %v2400, 0.0
    %2408 = vst [vmem:[#allocation10] sm:$0xff] %v2404
    %2409 = vst [vmem:[#allocation10 + $0x8] sm:$0xff] %v2405
    %s2410 = scalar_lea.vmem [#allocation10], 16
    %2411 = vst [vmem:[%s2410] sm:$0xff] %v2406
    %2412 = vst [vmem:[%s2410 + $0x8] sm:$0xff] %v2407
    // Predicated region
    $region30: #{tpu_custom_call.1} parent=1 // pred_check
      _
    $region31: #{tpu_custom_call.1} parent=1 // pred_check_branch
      %2414 = sbr.rel (0) target = $region33
    $region32: #{tpu_custom_call.1} parent=1 // pred_region
      %s2416 = ssub.s32 512, 512
      %2417 = vsyncadd [#allocation6], %s2416
      %s2418 = sshll.u32 [#allocation10], 4
      %s2419 = int_to_ptr.vmem [resolvable:$true] %s2418
      %2424 = dma.vmem_to_hbm [thread:$0]  %s2419, 512, %s4, [#allocation6], 256, 256, 16
    $region33: #{tpu_custom_call.1} parent=1 // pred_fallthru
      _
    // Predicated region
    $region34: #{tpu_custom_call.1} parent=1 // pred_check
      _
    $region35: #{tpu_custom_call.1} parent=1 // pred_check_branch
      %2426 = sbr.rel (0) target = $region37
    $region36: #{tpu_custom_call.1} parent=1 // pred_region
      %2427 = dma.done [#allocation6], 512
    $region37: #{tpu_custom_call.1} parent=1 // pred_fallthru
      _
    %2428 = vsyncpa [#allocation5], 1
    %2429 = vsyncpa [#allocation8], 1
    %2430 = vsyncpa [#allocation6], 1

</llo_original>
